<compile_context>
chip_gen: v5e
topology: v5e:2x2
jax: 0.10.0
libtpu: 0.0.40
codegen_flags: <defaults>
</compile_context>

<pallas_src>
import jax
import jax.numpy as jnp
from jax import lax
from jax.experimental import pallas as pl
from jax.experimental.pallas import tpu as pltpu


def _vmem():
    return pl.BlockSpec(memory_space=pltpu.MemorySpace.VMEM)


# ----------------------------------------------------------------------------
# Fused forward kernel.
#
# Layout convention inside the kernel: 2-D slabs [rows = height, cols = packed
# (channel, width)].
#   conv1 out  y1: [24, 144]  lanes = c*24 + q      (c in [0,6),  q in [0,24))
#   pooled1    p1: [12,  72]  lanes = c*12 + j
#   conv2 out  y2: [ 8, 128]  lanes = co*8 + n      (co in [0,16), n in [0,8))
#   pooled2    p2: [ 4,  64]  lanes = co*4 + nn
# Conv = sum over kh of (row-slice @ banded weight matrix)  -> pure MXU.
# 2x2 pool = max(even-select matmul, odd-select matmul) along W, then along H.
# ----------------------------------------------------------------------------
def fused_net_kernel(x_ref, a1_ref, sw1_ref, sh1_ref, brow1_ref,
                     a2_ref, sw2_ref, sh2_ref, brow2_ref,
                     wfc1_ref, bfc1_ref, wfc2_ref, bfc2_ref, o_ref):
    f32 = jnp.float32
    x = x_ref[...]                                               # [28, 28]

    # ---- conv1 (1 -> 6, k=5): 5 banded matmuls over the lane (W) axis ----
    y1 = jnp.zeros((24, 144), f32)
    for kh in range(5):
        y1 = y1 + jnp.dot(x[kh:kh + 24, :], a1_ref[kh],
                          preferred_element_type=f32)            # [24, 144]

    # ---- pool1 (2x2) + bias + ReLU (relu/pool commute; bias is per-channel) ----
    tw = jnp.maximum(jnp.dot(y1, sw1_ref[0], preferred_element_type=f32),
                     jnp.dot(y1, sw1_ref[1], preferred_element_type=f32))   # [24, 72]
    p1 = jnp.maximum(jnp.dot(sh1_ref[0], tw, preferred_element_type=f32),
                     jnp.dot(sh1_ref[1], tw, preferred_element_type=f32))   # [12, 72]
    p1 = jnp.maximum(p1 + brow1_ref[...], 0.0)                   # lanes = cin*12 + j

    # ---- conv2 (6 -> 16, k=5): 5 banded matmuls, output exactly 128 lanes ----
    y2 = jnp.zeros((8, 128), f32)
    for kh in range(5):
        y2 = y2 + jnp.dot(p1[kh:kh + 8, :], a2_ref[kh],
                          preferred_element_type=f32)            # [8, 128]

    # ---- pool2 (2x2) + bias + ReLU ----
    t2 = jnp.maximum(jnp.dot(y2, sw2_ref[0], preferred_element_type=f32),
                     jnp.dot(y2, sw2_ref[1], preferred_element_type=f32))   # [8, 64]
    p2 = jnp.maximum(jnp.dot(sh2_ref[0], t2, preferred_element_type=f32),
                     jnp.dot(sh2_ref[1], t2, preferred_element_type=f32))   # [4, 64]
    p2 = jnp.maximum(p2 + brow2_ref[...], 0.0)                   # lanes = co*4 + nn

    # Dropout2d: identity (eval mode).

    # ---- fc1 + ReLU (x.view(1, -1) is folded into the pre-permuted weight) ----
    h = bfc1_ref[...]                                            # [1, 64]
    for mm in range(4):
        h = h + jnp.dot(p2[mm:mm + 1, :], wfc1_ref[mm],
                        preferred_element_type=f32)              # [1, 64]
    h = jnp.maximum(h, 0.0)

    # ---- fc2 ----
    z = jnp.dot(h, wfc2_ref[...], preferred_element_type=f32) + bfc2_ref[...]   # [1, 3]

    # ---- hybrid quantum layer: E[bit] = P(|1>) = (1 + sin(theta)*cos(lam)) / 2 ----
    sin_t = jnp.sin(z[:, 0:1])                                   # theta = z[0, 0]
    cos_l = jnp.cos(z[:, 2:3])                                   # lam   = z[0, 2]
    expect = 0.5 * (1.0 + sin_t * cos_l)                         # [1, 1]

    # torch.cat((x, 1 - x), -1) -> [1, 2]
    col = lax.broadcasted_iota(jnp.int32, (1, 2), 1)
    o_ref[...] = jnp.where(col == 0, expect, 1.0 - expect)


def net_forward(x, kp):
    # x: [1, 1, 28, 28] NCHW, batch must be 1 (the module hard-codes view(1, -1)).
    x2d = x[0, 0].astype(jnp.float32)                            # [28, 28]
    return pl.pallas_call(
        fused_net_kernel,
        out_shape=jax.ShapeDtypeStruct((1, 2), jnp.float32),
        in_specs=[_vmem() for _ in range(13)],
        out_specs=_vmem(),
    )(x2d, kp["a1"], kp["sw1"], kp["sh1"], kp["brow1"],
      kp["a2"], kp["sw2"], kp["sh2"], kp["brow2"],
      kp["wfc1"], kp["bfc1"], kp["wfc2"], kp["bfc2"])


# ----------------------------------------------------------------------------
# Parameter init (PyTorch-style uniform(-1/sqrt(fan_in), ...)) and one-time
# pre-arrangement into kernel-ready layouts (hoisted out of the forward pass).
# ----------------------------------------------------------------------------
def init_params(key):
    ks = jax.random.split(key, 8)

    def unif(k, shape, fan_in):
        bound = 1.0 / jnp.sqrt(float(fan_in))
        return jax.random.uniform(k, shape, jnp.float32, -bound, bound)

    return {
        "conv1_w": unif(ks[0], (6, 1, 5, 5), 1 * 5 * 5),
        "conv1_b": unif(ks[1], (6,), 1 * 5 * 5),
        "conv2_w": unif(ks[2], (16, 6, 5, 5), 6 * 5 * 5),
        "conv2_b": unif(ks[3], (16,), 6 * 5 * 5),
        "fc1_w": unif(ks[4], (64, 256), 256),
        "fc1_b": unif(ks[5], (64,), 256),
        "fc2_w": unif(ks[6], (3, 64), 64),
        "fc2_b": unif(ks[7], (3,), 64),
    }


def prepare_params(p):
    """One-time repack of weights into the fused kernel's matmul layouts."""
    f32 = jnp.float32
    w1 = p["conv1_w"][:, 0]                       # [6, 5, 5]
    w2 = p["conv2_w"]                             # [16, 6, 5, 5]

    # conv1 banded matrices: a1[kh, w, c*24+q] = w1[c, kh, w-q] for 0 <= w-q <= 4.
    w_i = jnp.arange(28)[:, None]
    c_i = jnp.arange(144)[None, :] // 24
    q_i = jnp.arange(144)[None, :] % 24
    kw1 = w_i - q_i
    valid1 = (kw1 >= 0) & (kw1 <= 4)
    kw1c = jnp.clip(kw1, 0, 4)
    a1 = jnp.stack(
        [jnp.where(valid1, w1[c_i, kh, kw1c], 0.0) for kh in range(5)], axis=0
    ).astype(f32)                                 # [5, 28, 144]

    # conv2 banded matrices: a2[kh, cin*12+jj, co*8+n] = w2[co, cin, kh, jj-n].
    cin_i = jnp.arange(72)[:, None] // 12
    jj_i = jnp.arange(72)[:, None] % 12
    co_i = jnp.arange(128)[None, :] // 8
    n_i = jnp.arange(128)[None, :] % 8
    kw2 = jj_i - n_i
    valid2 = (kw2 >= 0) & (kw2 <= 4)
    kw2c = jnp.clip(kw2, 0, 4)
    a2 = jnp.stack(
        [jnp.where(valid2, w2[co_i, cin_i, kh, kw2c], 0.0) for kh in range(5)], axis=0
    ).astype(f32)                                 # [5, 72, 128]

    # 2x2-pool selection matrices (even / odd picks), per packed-lane layout.
    def wsel(c_blocks, width):
        rows = c_blocks * width
        cols = c_blocks * (width // 2)
        r_c = jnp.arange(rows)[:, None] // width
        r_q = jnp.arange(rows)[:, None] % width
        o_c = jnp.arange(cols)[None, :] // (width // 2)
        o_j = jnp.arange(cols)[None, :] % (width // 2)
        even = ((r_c == o_c) & (r_q == 2 * o_j)).astype(f32)
        odd = ((r_c == o_c) & (r_q == 2 * o_j + 1)).astype(f32)
        return jnp.stack([even, odd], axis=0)

    def hsel(height):
        h_i = jnp.arange(height)[None, :]
        o_i = jnp.arange(height // 2)[:, None]
        even = (h_i == 2 * o_i).astype(f32)
        odd = (h_i == 2 * o_i + 1).astype(f32)
        return jnp.stack([even, odd], axis=0)

    sw1 = wsel(6, 24)                             # [2, 144, 72]
    sh1 = hsel(24)                                # [2, 12, 24]
    sw2 = wsel(16, 8)                             # [2, 128, 64]
    sh2 = hsel(8)                                 # [2, 4, 8]

    brow1 = jnp.repeat(p["conv1_b"], 12)[None, :].astype(f32)    # [1, 72]
    brow2 = jnp.repeat(p["conv2_b"], 4)[None, :].astype(f32)     # [1, 64]

    # fc1 weight regrouped to match pooled2's [mm, co*4+nn] layout (folds view(1,-1)).
    wfc1 = jnp.transpose(p["fc1_w"].reshape(64, 16, 4, 4),
                         (2, 1, 3, 0)).reshape(4, 64, 64).astype(f32)  # [4, 64, 64]
    bfc1 = p["fc1_b"][None, :].astype(f32)                       # [1, 64]
    wfc2 = p["fc2_w"].T.astype(f32)                              # [64, 3]
    bfc2 = p["fc2_b"][None, :].astype(f32)                       # [1, 3]

    return {"a1": a1, "sw1": sw1, "sh1": sh1, "brow1": brow1,
            "a2": a2, "sw2": sw2, "sh2": sh2, "brow2": brow2,
            "wfc1": wfc1, "bfc1": bfc1, "wfc2": wfc2, "bfc2": bfc2}


if __name__ == "__main__":
    key = jax.random.PRNGKey(0)
    pkey, xkey = jax.random.split(key)
    params = init_params(pkey)
    kparams = prepare_params(params)   # one-time weight repack (hoisted from forward)

    # MNIST-like input: fc1(256) forces 28x28 spatial (16 * 4 * 4 = 256), batch = 1.
    x = jax.random.normal(xkey, (1, 1, 28, 28), jnp.float32)

    out = jax.jit(net_forward)(x, kparams)
    out = jax.block_until_ready(out)

    assert out.shape == (1, 2), out.shape
    assert bool(jnp.all(jnp.isfinite(out)))
    # Sanity: outputs are (p, 1-p) from the quantum-expectation surrogate.
    assert abs(float(out[0, 0] + out[0, 1]) - 1.0) < 1e-5

    print("KERNEL_OK")
</pallas_src>

<mosaic_0001>
module attributes {stable_mosaic.version = 11 : i64} {
  func.func @fused_net_kernel(%arg0: memref<28x28xf32, #tpu.memory_space<vmem>>, %arg1: memref<5x28x144xf32, #tpu.memory_space<vmem>>, %arg2: memref<2x144x72xf32, #tpu.memory_space<vmem>>, %arg3: memref<2x12x24xf32, #tpu.memory_space<vmem>>, %arg4: memref<1x72xf32, #tpu.memory_space<vmem>>, %arg5: memref<5x72x128xf32, #tpu.memory_space<vmem>>, %arg6: memref<2x128x64xf32, #tpu.memory_space<vmem>>, %arg7: memref<2x4x8xf32, #tpu.memory_space<vmem>>, %arg8: memref<1x64xf32, #tpu.memory_space<vmem>>, %arg9: memref<4x64x64xf32, #tpu.memory_space<vmem>>, %arg10: memref<1x64xf32, #tpu.memory_space<vmem>>, %arg11: memref<64x3xf32, #tpu.memory_space<vmem>>, %arg12: memref<1x3xf32, #tpu.memory_space<vmem>>, %arg13: memref<1x2xf32, #tpu.memory_space<vmem>>) attributes {dimension_semantics = [], scalar_prefetch = 0 : i64, scratch_operands = 0 : i64, tpu.core_type = #tpu.core_type<tc>} {
    %c0 = arith.constant 0 : index
    %c0_0 = arith.constant 0 : index
    %0 = vector.load %arg0[%c0, %c0_0] : memref<28x28xf32, #tpu.memory_space<vmem>>, vector<28x28xf32>
    %cst = arith.constant 0.000000e+00 : f32
    %1 = vector.broadcast %cst : f32 to vector<24x144xf32>
    %2 = vector.extract_strided_slice %0 {offsets = [0, 0], sizes = [24, 28], strides = [1, 1]} : vector<28x28xf32> to vector<24x28xf32>
    %c0_1 = arith.constant 0 : index
    %c0_2 = arith.constant 0 : index
    %c0_3 = arith.constant 0 : index
    %3 = vector.load %arg1[%c0_1, %c0_2, %c0_3] : memref<5x28x144xf32, #tpu.memory_space<vmem>>, vector<1x28x144xf32>
    %4 = vector.shape_cast %3 : vector<1x28x144xf32> to vector<28x144xf32>
    %cst_4 = arith.constant dense<0.000000e+00> : vector<24x144xf32>
    %5 = tpu.matmul %2, %4, %cst_4 {dimension_numbers = #tpu.dot_dimension_numbers<[1], [0], [0], [1], [0, 0, 1, 1], [], []>} : vector<24x28xf32>, vector<28x144xf32>, vector<24x144xf32> -> vector<24x144xf32>
    %6 = arith.addf %1, %5 : vector<24x144xf32>
    %7 = vector.extract_strided_slice %0 {offsets = [1, 0], sizes = [24, 28], strides = [1, 1]} : vector<28x28xf32> to vector<24x28xf32>
    %c1 = arith.constant 1 : index
    %c0_5 = arith.constant 0 : index
    %c0_6 = arith.constant 0 : index
    %8 = vector.load %arg1[%c1, %c0_5, %c0_6] : memref<5x28x144xf32, #tpu.memory_space<vmem>>, vector<1x28x144xf32>
    %9 = vector.shape_cast %8 : vector<1x28x144xf32> to vector<28x144xf32>
    %cst_7 = arith.constant dense<0.000000e+00> : vector<24x144xf32>
    %10 = tpu.matmul %7, %9, %cst_7 {dimension_numbers = #tpu.dot_dimension_numbers<[1], [0], [0], [1], [0, 0, 1, 1], [], []>} : vector<24x28xf32>, vector<28x144xf32>, vector<24x144xf32> -> vector<24x144xf32>
    %11 = arith.addf %6, %10 : vector<24x144xf32>
    %12 = vector.extract_strided_slice %0 {offsets = [2, 0], sizes = [24, 28], strides = [1, 1]} : vector<28x28xf32> to vector<24x28xf32>
    %c2 = arith.constant 2 : index
    %c0_8 = arith.constant 0 : index
    %c0_9 = arith.constant 0 : index
    %13 = vector.load %arg1[%c2, %c0_8, %c0_9] : memref<5x28x144xf32, #tpu.memory_space<vmem>>, vector<1x28x144xf32>
    %14 = vector.shape_cast %13 : vector<1x28x144xf32> to vector<28x144xf32>
    %cst_10 = arith.constant dense<0.000000e+00> : vector<24x144xf32>
    %15 = tpu.matmul %12, %14, %cst_10 {dimension_numbers = #tpu.dot_dimension_numbers<[1], [0], [0], [1], [0, 0, 1, 1], [], []>} : vector<24x28xf32>, vector<28x144xf32>, vector<24x144xf32> -> vector<24x144xf32>
    %16 = arith.addf %11, %15 : vector<24x144xf32>
    %17 = vector.extract_strided_slice %0 {offsets = [3, 0], sizes = [24, 28], strides = [1, 1]} : vector<28x28xf32> to vector<24x28xf32>
    %c3 = arith.constant 3 : index
    %c0_11 = arith.constant 0 : index
    %c0_12 = arith.constant 0 : index
    %18 = vector.load %arg1[%c3, %c0_11, %c0_12] : memref<5x28x144xf32, #tpu.memory_space<vmem>>, vector<1x28x144xf32>
    %19 = vector.shape_cast %18 : vector<1x28x144xf32> to vector<28x144xf32>
    %cst_13 = arith.constant dense<0.000000e+00> : vector<24x144xf32>
    %20 = tpu.matmul %17, %19, %cst_13 {dimension_numbers = #tpu.dot_dimension_numbers<[1], [0], [0], [1], [0, 0, 1, 1], [], []>} : vector<24x28xf32>, vector<28x144xf32>, vector<24x144xf32> -> vector<24x144xf32>
    %21 = arith.addf %16, %20 : vector<24x144xf32>
    %22 = vector.extract_strided_slice %0 {offsets = [4, 0], sizes = [24, 28], strides = [1, 1]} : vector<28x28xf32> to vector<24x28xf32>
    %c4 = arith.constant 4 : index
    %c0_14 = arith.constant 0 : index
    %c0_15 = arith.constant 0 : index
    %23 = vector.load %arg1[%c4, %c0_14, %c0_15] : memref<5x28x144xf32, #tpu.memory_space<vmem>>, vector<1x28x144xf32>
    %24 = vector.shape_cast %23 : vector<1x28x144xf32> to vector<28x144xf32>
    %cst_16 = arith.constant dense<0.000000e+00> : vector<24x144xf32>
    %25 = tpu.matmul %22, %24, %cst_16 {dimension_numbers = #tpu.dot_dimension_numbers<[1], [0], [0], [1], [0, 0, 1, 1], [], []>} : vector<24x28xf32>, vector<28x144xf32>, vector<24x144xf32> -> vector<24x144xf32>
    %26 = arith.addf %21, %25 : vector<24x144xf32>
    %c0_17 = arith.constant 0 : index
    %c0_18 = arith.constant 0 : index
    %c0_19 = arith.constant 0 : index
    %27 = vector.load %arg2[%c0_17, %c0_18, %c0_19] : memref<2x144x72xf32, #tpu.memory_space<vmem>>, vector<1x144x72xf32>
    %28 = vector.shape_cast %27 : vector<1x144x72xf32> to vector<144x72xf32>
    %cst_20 = arith.constant dense<0.000000e+00> : vector<24x72xf32>
    %29 = tpu.matmul %26, %28, %cst_20 {dimension_numbers = #tpu.dot_dimension_numbers<[1], [0], [0], [1], [0, 0, 1, 1], [], []>} : vector<24x144xf32>, vector<144x72xf32>, vector<24x72xf32> -> vector<24x72xf32>
    %c1_21 = arith.constant 1 : index
    %c0_22 = arith.constant 0 : index
    %c0_23 = arith.constant 0 : index
    %30 = vector.load %arg2[%c1_21, %c0_22, %c0_23] : memref<2x144x72xf32, #tpu.memory_space<vmem>>, vector<1x144x72xf32>
    %31 = vector.shape_cast %30 : vector<1x144x72xf32> to vector<144x72xf32>
    %cst_24 = arith.constant dense<0.000000e+00> : vector<24x72xf32>
    %32 = tpu.matmul %26, %31, %cst_24 {dimension_numbers = #tpu.dot_dimension_numbers<[1], [0], [0], [1], [0, 0, 1, 1], [], []>} : vector<24x144xf32>, vector<144x72xf32>, vector<24x72xf32> -> vector<24x72xf32>
    %33 = arith.maximumf %29, %32 : vector<24x72xf32>
    %c0_25 = arith.constant 0 : index
    %c0_26 = arith.constant 0 : index
    %c0_27 = arith.constant 0 : index
    %34 = vector.load %arg3[%c0_25, %c0_26, %c0_27] : memref<2x12x24xf32, #tpu.memory_space<vmem>>, vector<1x12x24xf32>
    %35 = vector.shape_cast %34 : vector<1x12x24xf32> to vector<12x24xf32>
    %cst_28 = arith.constant dense<0.000000e+00> : vector<12x72xf32>
    %36 = tpu.matmul %35, %33, %cst_28 {dimension_numbers = #tpu.dot_dimension_numbers<[1], [0], [0], [1], [0, 0, 1, 1], [], []>} : vector<12x24xf32>, vector<24x72xf32>, vector<12x72xf32> -> vector<12x72xf32>
    %c1_29 = arith.constant 1 : index
    %c0_30 = arith.constant 0 : index
    %c0_31 = arith.constant 0 : index
    %37 = vector.load %arg3[%c1_29, %c0_30, %c0_31] : memref<2x12x24xf32, #tpu.memory_space<vmem>>, vector<1x12x24xf32>
    %38 = vector.shape_cast %37 : vector<1x12x24xf32> to vector<12x24xf32>
    %cst_32 = arith.constant dense<0.000000e+00> : vector<12x72xf32>
    %39 = tpu.matmul %38, %33, %cst_32 {dimension_numbers = #tpu.dot_dimension_numbers<[1], [0], [0], [1], [0, 0, 1, 1], [], []>} : vector<12x24xf32>, vector<24x72xf32>, vector<12x72xf32> -> vector<12x72xf32>
    %40 = arith.maximumf %36, %39 : vector<12x72xf32>
    %c0_33 = arith.constant 0 : index
    %c0_34 = arith.constant 0 : index
    %41 = vector.load %arg4[%c0_33, %c0_34] : memref<1x72xf32, #tpu.memory_space<vmem>>, vector<1x72xf32>
    %42 = vector.broadcast %41 : vector<1x72xf32> to vector<12x72xf32>
    %43 = arith.addf %40, %42 : vector<12x72xf32>
    %cst_35 = arith.constant 0.000000e+00 : f32
    %44 = vector.broadcast %cst_35 : f32 to vector<12x72xf32>
    %45 = arith.maximumf %43, %44 : vector<12x72xf32>
    %cst_36 = arith.constant 0.000000e+00 : f32
    %46 = vector.broadcast %cst_36 : f32 to vector<8x128xf32>
    %47 = vector.extract_strided_slice %45 {offsets = [0, 0], sizes = [8, 72], strides = [1, 1]} : vector<12x72xf32> to vector<8x72xf32>
    %c0_37 = arith.constant 0 : index
    %c0_38 = arith.constant 0 : index
    %c0_39 = arith.constant 0 : index
    %48 = vector.load %arg5[%c0_37, %c0_38, %c0_39] : memref<5x72x128xf32, #tpu.memory_space<vmem>>, vector<1x72x128xf32>
    %49 = vector.shape_cast %48 : vector<1x72x128xf32> to vector<72x128xf32>
    %cst_40 = arith.constant dense<0.000000e+00> : vector<8x128xf32>
    %50 = tpu.matmul %47, %49, %cst_40 {dimension_numbers = #tpu.dot_dimension_numbers<[1], [0], [0], [1], [0, 0, 1, 1], [], []>} : vector<8x72xf32>, vector<72x128xf32>, vector<8x128xf32> -> vector<8x128xf32>
    %51 = arith.addf %46, %50 : vector<8x128xf32>
    %52 = vector.extract_strided_slice %45 {offsets = [1, 0], sizes = [8, 72], strides = [1, 1]} : vector<12x72xf32> to vector<8x72xf32>
    %c1_41 = arith.constant 1 : index
    %c0_42 = arith.constant 0 : index
    %c0_43 = arith.constant 0 : index
    %53 = vector.load %arg5[%c1_41, %c0_42, %c0_43] : memref<5x72x128xf32, #tpu.memory_space<vmem>>, vector<1x72x128xf32>
    %54 = vector.shape_cast %53 : vector<1x72x128xf32> to vector<72x128xf32>
    %cst_44 = arith.constant dense<0.000000e+00> : vector<8x128xf32>
    %55 = tpu.matmul %52, %54, %cst_44 {dimension_numbers = #tpu.dot_dimension_numbers<[1], [0], [0], [1], [0, 0, 1, 1], [], []>} : vector<8x72xf32>, vector<72x128xf32>, vector<8x128xf32> -> vector<8x128xf32>
    %56 = arith.addf %51, %55 : vector<8x128xf32>
    %57 = vector.extract_strided_slice %45 {offsets = [2, 0], sizes = [8, 72], strides = [1, 1]} : vector<12x72xf32> to vector<8x72xf32>
    %c2_45 = arith.constant 2 : index
    %c0_46 = arith.constant 0 : index
    %c0_47 = arith.constant 0 : index
    %58 = vector.load %arg5[%c2_45, %c0_46, %c0_47] : memref<5x72x128xf32, #tpu.memory_space<vmem>>, vector<1x72x128xf32>
    %59 = vector.shape_cast %58 : vector<1x72x128xf32> to vector<72x128xf32>
    %cst_48 = arith.constant dense<0.000000e+00> : vector<8x128xf32>
    %60 = tpu.matmul %57, %59, %cst_48 {dimension_numbers = #tpu.dot_dimension_numbers<[1], [0], [0], [1], [0, 0, 1, 1], [], []>} : vector<8x72xf32>, vector<72x128xf32>, vector<8x128xf32> -> vector<8x128xf32>
    %61 = arith.addf %56, %60 : vector<8x128xf32>
    %62 = vector.extract_strided_slice %45 {offsets = [3, 0], sizes = [8, 72], strides = [1, 1]} : vector<12x72xf32> to vector<8x72xf32>
    %c3_49 = arith.constant 3 : index
    %c0_50 = arith.constant 0 : index
    %c0_51 = arith.constant 0 : index
    %63 = vector.load %arg5[%c3_49, %c0_50, %c0_51] : memref<5x72x128xf32, #tpu.memory_space<vmem>>, vector<1x72x128xf32>
    %64 = vector.shape_cast %63 : vector<1x72x128xf32> to vector<72x128xf32>
    %cst_52 = arith.constant dense<0.000000e+00> : vector<8x128xf32>
    %65 = tpu.matmul %62, %64, %cst_52 {dimension_numbers = #tpu.dot_dimension_numbers<[1], [0], [0], [1], [0, 0, 1, 1], [], []>} : vector<8x72xf32>, vector<72x128xf32>, vector<8x128xf32> -> vector<8x128xf32>
    %66 = arith.addf %61, %65 : vector<8x128xf32>
    %67 = vector.extract_strided_slice %45 {offsets = [4, 0], sizes = [8, 72], strides = [1, 1]} : vector<12x72xf32> to vector<8x72xf32>
    %c4_53 = arith.constant 4 : index
    %c0_54 = arith.constant 0 : index
    %c0_55 = arith.constant 0 : index
    %68 = vector.load %arg5[%c4_53, %c0_54, %c0_55] : memref<5x72x128xf32, #tpu.memory_space<vmem>>, vector<1x72x128xf32>
    %69 = vector.shape_cast %68 : vector<1x72x128xf32> to vector<72x128xf32>
    %cst_56 = arith.constant dense<0.000000e+00> : vector<8x128xf32>
    %70 = tpu.matmul %67, %69, %cst_56 {dimension_numbers = #tpu.dot_dimension_numbers<[1], [0], [0], [1], [0, 0, 1, 1], [], []>} : vector<8x72xf32>, vector<72x128xf32>, vector<8x128xf32> -> vector<8x128xf32>
    %71 = arith.addf %66, %70 : vector<8x128xf32>
    %c0_57 = arith.constant 0 : index
    %c0_58 = arith.constant 0 : index
    %c0_59 = arith.constant 0 : index
    %72 = vector.load %arg6[%c0_57, %c0_58, %c0_59] : memref<2x128x64xf32, #tpu.memory_space<vmem>>, vector<1x128x64xf32>
    %73 = vector.shape_cast %72 : vector<1x128x64xf32> to vector<128x64xf32>
    %cst_60 = arith.constant dense<0.000000e+00> : vector<8x64xf32>
    %74 = tpu.matmul %71, %73, %cst_60 {dimension_numbers = #tpu.dot_dimension_numbers<[1], [0], [0], [1], [0, 0, 1, 1], [], []>} : vector<8x128xf32>, vector<128x64xf32>, vector<8x64xf32> -> vector<8x64xf32>
    %c1_61 = arith.constant 1 : index
    %c0_62 = arith.constant 0 : index
    %c0_63 = arith.constant 0 : index
    %75 = vector.load %arg6[%c1_61, %c0_62, %c0_63] : memref<2x128x64xf32, #tpu.memory_space<vmem>>, vector<1x128x64xf32>
    %76 = vector.shape_cast %75 : vector<1x128x64xf32> to vector<128x64xf32>
    %cst_64 = arith.constant dense<0.000000e+00> : vector<8x64xf32>
    %77 = tpu.matmul %71, %76, %cst_64 {dimension_numbers = #tpu.dot_dimension_numbers<[1], [0], [0], [1], [0, 0, 1, 1], [], []>} : vector<8x128xf32>, vector<128x64xf32>, vector<8x64xf32> -> vector<8x64xf32>
    %78 = arith.maximumf %74, %77 : vector<8x64xf32>
    %c0_65 = arith.constant 0 : index
    %c0_66 = arith.constant 0 : index
    %c0_67 = arith.constant 0 : index
    %79 = vector.load %arg7[%c0_65, %c0_66, %c0_67] : memref<2x4x8xf32, #tpu.memory_space<vmem>>, vector<1x4x8xf32>
    %80 = vector.shape_cast %79 : vector<1x4x8xf32> to vector<4x8xf32>
    %cst_68 = arith.constant dense<0.000000e+00> : vector<4x64xf32>
    %81 = tpu.matmul %80, %78, %cst_68 {dimension_numbers = #tpu.dot_dimension_numbers<[1], [0], [0], [1], [0, 0, 1, 1], [], []>} : vector<4x8xf32>, vector<8x64xf32>, vector<4x64xf32> -> vector<4x64xf32>
    %c1_69 = arith.constant 1 : index
    %c0_70 = arith.constant 0 : index
    %c0_71 = arith.constant 0 : index
    %82 = vector.load %arg7[%c1_69, %c0_70, %c0_71] : memref<2x4x8xf32, #tpu.memory_space<vmem>>, vector<1x4x8xf32>
    %83 = vector.shape_cast %82 : vector<1x4x8xf32> to vector<4x8xf32>
    %cst_72 = arith.constant dense<0.000000e+00> : vector<4x64xf32>
    %84 = tpu.matmul %83, %78, %cst_72 {dimension_numbers = #tpu.dot_dimension_numbers<[1], [0], [0], [1], [0, 0, 1, 1], [], []>} : vector<4x8xf32>, vector<8x64xf32>, vector<4x64xf32> -> vector<4x64xf32>
    %85 = arith.maximumf %81, %84 : vector<4x64xf32>
    %c0_73 = arith.constant 0 : index
    %c0_74 = arith.constant 0 : index
    %86 = vector.load %arg8[%c0_73, %c0_74] : memref<1x64xf32, #tpu.memory_space<vmem>>, vector<1x64xf32>
    %87 = vector.broadcast %86 : vector<1x64xf32> to vector<4x64xf32>
    %88 = arith.addf %85, %87 : vector<4x64xf32>
    %cst_75 = arith.constant 0.000000e+00 : f32
    %89 = vector.broadcast %cst_75 : f32 to vector<4x64xf32>
    %90 = arith.maximumf %88, %89 : vector<4x64xf32>
    %c0_76 = arith.constant 0 : index
    %c0_77 = arith.constant 0 : index
    %91 = vector.load %arg10[%c0_76, %c0_77] : memref<1x64xf32, #tpu.memory_space<vmem>>, vector<1x64xf32>
    %92 = vector.extract_strided_slice %90 {offsets = [0, 0], sizes = [1, 64], strides = [1, 1]} : vector<4x64xf32> to vector<1x64xf32>
    %c0_78 = arith.constant 0 : index
    %c0_79 = arith.constant 0 : index
    %c0_80 = arith.constant 0 : index
    %93 = vector.load %arg9[%c0_78, %c0_79, %c0_80] : memref<4x64x64xf32, #tpu.memory_space<vmem>>, vector<1x64x64xf32>
    %94 = vector.shape_cast %93 : vector<1x64x64xf32> to vector<64x64xf32>
    %cst_81 = arith.constant dense<0.000000e+00> : vector<1x64xf32>
    %95 = tpu.matmul %92, %94, %cst_81 {dimension_numbers = #tpu.dot_dimension_numbers<[1], [0], [0], [1], [0, 0, 1, 1], [], []>} : vector<1x64xf32>, vector<64x64xf32>, vector<1x64xf32> -> vector<1x64xf32>
    %96 = arith.addf %91, %95 : vector<1x64xf32>
    %97 = vector.extract_strided_slice %90 {offsets = [1, 0], sizes = [1, 64], strides = [1, 1]} : vector<4x64xf32> to vector<1x64xf32>
    %c1_82 = arith.constant 1 : index
    %c0_83 = arith.constant 0 : index
    %c0_84 = arith.constant 0 : index
    %98 = vector.load %arg9[%c1_82, %c0_83, %c0_84] : memref<4x64x64xf32, #tpu.memory_space<vmem>>, vector<1x64x64xf32>
    %99 = vector.shape_cast %98 : vector<1x64x64xf32> to vector<64x64xf32>
    %cst_85 = arith.constant dense<0.000000e+00> : vector<1x64xf32>
    %100 = tpu.matmul %97, %99, %cst_85 {dimension_numbers = #tpu.dot_dimension_numbers<[1], [0], [0], [1], [0, 0, 1, 1], [], []>} : vector<1x64xf32>, vector<64x64xf32>, vector<1x64xf32> -> vector<1x64xf32>
    %101 = arith.addf %96, %100 : vector<1x64xf32>
    %102 = vector.extract_strided_slice %90 {offsets = [2, 0], sizes = [1, 64], strides = [1, 1]} : vector<4x64xf32> to vector<1x64xf32>
    %c2_86 = arith.constant 2 : index
    %c0_87 = arith.constant 0 : index
    %c0_88 = arith.constant 0 : index
    %103 = vector.load %arg9[%c2_86, %c0_87, %c0_88] : memref<4x64x64xf32, #tpu.memory_space<vmem>>, vector<1x64x64xf32>
    %104 = vector.shape_cast %103 : vector<1x64x64xf32> to vector<64x64xf32>
    %cst_89 = arith.constant dense<0.000000e+00> : vector<1x64xf32>
    %105 = tpu.matmul %102, %104, %cst_89 {dimension_numbers = #tpu.dot_dimension_numbers<[1], [0], [0], [1], [0, 0, 1, 1], [], []>} : vector<1x64xf32>, vector<64x64xf32>, vector<1x64xf32> -> vector<1x64xf32>
    %106 = arith.addf %101, %105 : vector<1x64xf32>
    %107 = vector.extract_strided_slice %90 {offsets = [3, 0], sizes = [1, 64], strides = [1, 1]} : vector<4x64xf32> to vector<1x64xf32>
    %c3_90 = arith.constant 3 : index
    %c0_91 = arith.constant 0 : index
    %c0_92 = arith.constant 0 : index
    %108 = vector.load %arg9[%c3_90, %c0_91, %c0_92] : memref<4x64x64xf32, #tpu.memory_space<vmem>>, vector<1x64x64xf32>
    %109 = vector.shape_cast %108 : vector<1x64x64xf32> to vector<64x64xf32>
    %cst_93 = arith.constant dense<0.000000e+00> : vector<1x64xf32>
    %110 = tpu.matmul %107, %109, %cst_93 {dimension_numbers = #tpu.dot_dimension_numbers<[1], [0], [0], [1], [0, 0, 1, 1], [], []>} : vector<1x64xf32>, vector<64x64xf32>, vector<1x64xf32> -> vector<1x64xf32>
    %111 = arith.addf %106, %110 : vector<1x64xf32>
    %cst_94 = arith.constant 0.000000e+00 : f32
    %112 = vector.broadcast %cst_94 : f32 to vector<1x64xf32>
    %113 = arith.maximumf %111, %112 : vector<1x64xf32>
    %c0_95 = arith.constant 0 : index
    %c0_96 = arith.constant 0 : index
    %114 = vector.load %arg11[%c0_95, %c0_96] : memref<64x3xf32, #tpu.memory_space<vmem>>, vector<64x3xf32>
    %cst_97 = arith.constant dense<0.000000e+00> : vector<1x3xf32>
    %115 = tpu.matmul %113, %114, %cst_97 {dimension_numbers = #tpu.dot_dimension_numbers<[1], [0], [0], [1], [0, 0, 1, 1], [], []>} : vector<1x64xf32>, vector<64x3xf32>, vector<1x3xf32> -> vector<1x3xf32>
    %c0_98 = arith.constant 0 : index
    %c0_99 = arith.constant 0 : index
    %116 = vector.load %arg12[%c0_98, %c0_99] : memref<1x3xf32, #tpu.memory_space<vmem>>, vector<1x3xf32>
    %117 = arith.addf %115, %116 : vector<1x3xf32>
    %118 = vector.extract_strided_slice %117 {offsets = [0, 0], sizes = [1, 1], strides = [1, 1]} : vector<1x3xf32> to vector<1x1xf32>
    %119 = math.sin %118 : vector<1x1xf32>
    %120 = vector.extract_strided_slice %117 {offsets = [0, 2], sizes = [1, 1], strides = [1, 1]} : vector<1x3xf32> to vector<1x1xf32>
    %121 = math.cos %120 : vector<1x1xf32>
    %122 = arith.mulf %119, %121 : vector<1x1xf32>
    %cst_100 = arith.constant 1.000000e+00 : f32
    %123 = vector.broadcast %cst_100 : f32 to vector<1x1xf32>
    %124 = arith.addf %123, %122 : vector<1x1xf32>
    %cst_101 = arith.constant 5.000000e-01 : f32
    %125 = vector.broadcast %cst_101 : f32 to vector<1x1xf32>
    %126 = arith.mulf %125, %124 : vector<1x1xf32>
    %127 = tpu.iota {dimensions = array<i32: 1>} : vector<1x2xi32>
    %c0_i32 = arith.constant 0 : i32
    %128 = vector.broadcast %c0_i32 : i32 to vector<1x2xi32>
    %129 = arith.cmpi eq, %127, %128 : vector<1x2xi32>
    %cst_102 = arith.constant 1.000000e+00 : f32
    %130 = vector.broadcast %cst_102 : f32 to vector<1x1xf32>
    %131 = arith.subf %130, %126 : vector<1x1xf32>
    %132 = vector.shape_cast %126 : vector<1x1xf32> to vector<1x1xf32>
    %133 = vector.broadcast %132 : vector<1x1xf32> to vector<1x2xf32>
    %134 = vector.shape_cast %131 : vector<1x1xf32> to vector<1x1xf32>
    %135 = vector.broadcast %134 : vector<1x1xf32> to vector<1x2xf32>
    %136 = arith.select %129, %133, %135 : vector<1x2xi1>, vector<1x2xf32>
    %c0_103 = arith.constant 0 : index
    %c0_104 = arith.constant 0 : index
    %137 = vector.load %arg13[%c0_103, %c0_104] : memref<1x2xf32, #tpu.memory_space<vmem>>, vector<1x2xf32>
    tpu.vector_store %arg13[%c0_103, %c0_104], %136 {strides = array<i32>} : memref<1x2xf32, #tpu.memory_space<vmem>>, vector<1x2xf32>,
    return
  }
}

</mosaic_0001>

<llo_original>
// kernel: net_forward.1
$region0: #{net_forward.1}
  #allocation0 [shape = 'u32[]', space=smem, size = 0x4, offset = 0x4, fixed_abs, tag = 'smem constant byte address 0x4 - core index']
  #allocation1 [shape = 'u32[72,128]{1,0:T(1,128)}', space=vmem, size = 0x9000, scoped, tag = 'internal scratch']
  %s0 = inlined_call_operand.vmem [shape: f32[28,28], index: 0, kind: input, shape index: {}]
  %s1 = inlined_call_operand.hbm [shape: f32[5,28,144], index: 1, kind: input, shape index: {}]
  %s2 = inlined_call_operand.hbm [shape: f32[2,144,72], index: 2, kind: input, shape index: {}]
  %s3 = inlined_call_operand.vmem [shape: f32[2,12,24], index: 3, kind: input, shape index: {}]
  %s4 = inlined_call_operand.vmem [shape: f32[1,72], index: 4, kind: input, shape index: {}]
  %s5 = inlined_call_operand.vmem [shape: f32[5,72,128], index: 5, kind: input, shape index: {}]
  %s6 = inlined_call_operand.vmem [shape: f32[2,128,64], index: 6, kind: input, shape index: {}]
  %s7 = inlined_call_operand.vmem [shape: f32[2,4,8], index: 7, kind: input, shape index: {}]
  %s8 = inlined_call_operand.vmem [shape: f32[1,64], index: 8, kind: input, shape index: {}]
  %s9 = inlined_call_operand.hbm [shape: f32[4,64,64], index: 9, kind: input, shape index: {}]
  %s10 = inlined_call_operand.vmem [shape: f32[1,64], index: 10, kind: input, shape index: {}]
  %s11 = inlined_call_operand.vmem [shape: f32[64,3], index: 11, kind: input, shape index: {}]
  %s12 = inlined_call_operand.vmem [shape: f32[1,3], index: 12, kind: input, shape index: {}]
  %s13 = inlined_call_operand.hbm [shape: f32[1,2], index: 13, kind: output, shape index: {}]
  %s14 = sld [smem:[#allocation0]]
  $region74: #{net_forward.1} parent=0
    _
  %s16 = ssub.s32 1, %s14
  %s17 = scalar_select 0, %s16, %s14
  $region1: #{net_forward.1} parent=0
    #allocation2 [shape = 'u8[163840]{0}', space=vmem, size = 0x28000, scoped, tag = 'input window, operand 1, single buffered']
    #allocation3 [shape = 's32[1]{0}', space=sflag, size = 0x4, scoped, tag = 'scoped memory for net_forward.1']
    #allocation4 [shape = 's32[1]{0}', space=sflag, size = 0x4, scoped, tag = 'scoped memory for net_forward.1']
    #allocation5 [shape = 'u8[147456]{0}', space=vmem, size = 0x24000, scoped, tag = 'input window, operand 2, single buffered']
    #allocation6 [shape = 's32[1]{0}', space=sflag, size = 0x4, scoped, tag = 'scoped memory for net_forward.1']
    #allocation7 [shape = 'u8[131072]{0}', space=vmem, size = 0x20000, scoped, tag = 'input window, operand 9, single buffered']
    #allocation8 [shape = 'u8[512]{0}', space=vmem, size = 0x400, scoped, tag = 'output window, operand 0, single buffered']
    %18 = vsyncpa [#allocation3], 0
    %19 = vsyncpa [#allocation6], 0
    %20 = vsyncpa [#allocation4], 0
    // Predicated region
    $region2: #{net_forward.1} parent=1 // pred_check
      _
    $region3: #{net_forward.1} parent=1 // pred_check_branch
      %22 = sbr.rel (0) target = $region5
    $region4: #{net_forward.1} parent=1 // pred_region
      _
    $region5: #{net_forward.1} parent=1 // pred_fallthru
      _
    // Predicated region
    $region6: #{net_forward.1} parent=1 // pred_check
      _
    $region7: #{net_forward.1} parent=1 // pred_check_branch
      %24 = sbr.rel (0) target = $region9
    $region8: #{net_forward.1} parent=1 // pred_region
      %26 = vsyncadd [#allocation3], 0
      %s27 = sshll.u32 %s1, 4
      %s28 = int_to_ptr.hbm [resolvable:$true] %s27
      %s29 = sshll.u32 [#allocation2], 4
      %s30 = int_to_ptr.vmem [resolvable:$true] %s29
      %35 = dma.hbm_to_vmem [thread:$0]  %s28, 5120, %s30, [#allocation3], 256, 256, 16
    $region9: #{net_forward.1} parent=1 // pred_fallthru
      _
    // Predicated region
    $region10: #{net_forward.1} parent=1 // pred_check
      _
    $region11: #{net_forward.1} parent=1 // pred_check_branch
      %37 = sbr.rel (0) target = $region13
    $region12: #{net_forward.1} parent=1 // pred_region
      %39 = vsyncadd [#allocation6], 0
      %s40 = sshll.u32 %s2, 4
      %s41 = int_to_ptr.hbm [resolvable:$true] %s40
      %s42 = sshll.u32 [#allocation5], 4
      %s43 = int_to_ptr.vmem [resolvable:$true] %s42
      %48 = dma.hbm_to_vmem [thread:$0]  %s41, 4608, %s43, [#allocation6], 128, 128, 8
    $region13: #{net_forward.1} parent=1 // pred_fallthru
      _
    // Predicated region
    $region14: #{net_forward.1} parent=1 // pred_check
      _
    $region15: #{net_forward.1} parent=1 // pred_check_branch
      %50 = sbr.rel (0) target = $region17
    $region16: #{net_forward.1} parent=1 // pred_region
      _
    $region17: #{net_forward.1} parent=1 // pred_fallthru
      _
    // Predicated region
    $region18: #{net_forward.1} parent=1 // pred_check
      _
    $region19: #{net_forward.1} parent=1 // pred_check_branch
      %52 = sbr.rel (0) target = $region21
    $region20: #{net_forward.1} parent=1 // pred_region
      _
    $region21: #{net_forward.1} parent=1 // pred_fallthru
      _
    // Predicated region
    $region22: #{net_forward.1} parent=1 // pred_check
      _
    $region23: #{net_forward.1} parent=1 // pred_check_branch
      %54 = sbr.rel (0) target = $region25
    $region24: #{net_forward.1} parent=1 // pred_region
      _
    $region25: #{net_forward.1} parent=1 // pred_fallthru
      _
    // Predicated region
    $region26: #{net_forward.1} parent=1 // pred_check
      _
    $region27: #{net_forward.1} parent=1 // pred_check_branch
      %56 = sbr.rel (0) target = $region29
    $region28: #{net_forward.1} parent=1 // pred_region
      _
    $region29: #{net_forward.1} parent=1 // pred_fallthru
      _
    // Predicated region
    $region30: #{net_forward.1} parent=1 // pred_check
      _
    $region31: #{net_forward.1} parent=1 // pred_check_branch
      %58 = sbr.rel (0) target = $region33
    $region32: #{net_forward.1} parent=1 // pred_region
      _
    $region33: #{net_forward.1} parent=1 // pred_fallthru
      _
    // Predicated region
    $region34: #{net_forward.1} parent=1 // pred_check
      _
    $region35: #{net_forward.1} parent=1 // pred_check_branch
      %60 = sbr.rel (0) target = $region37
    $region36: #{net_forward.1} parent=1 // pred_region
      _
    $region37: #{net_forward.1} parent=1 // pred_fallthru
      _
    // Predicated region
    $region38: #{net_forward.1} parent=1 // pred_check
      _
    $region39: #{net_forward.1} parent=1 // pred_check_branch
      %62 = sbr.rel (0) target = $region41
    $region40: #{net_forward.1} parent=1 // pred_region
      %64 = vsyncadd [#allocation6], 0
      %s65 = sshll.u32 %s9, 4
      %s66 = int_to_ptr.hbm [resolvable:$true] %s65
      %s67 = sshll.u32 [#allocation7], 4
      %s68 = int_to_ptr.vmem [resolvable:$true] %s67
      %73 = dma.hbm_to_vmem [thread:$0]  %s66, 4096, %s68, [#allocation6], 128, 128, 8
    $region41: #{net_forward.1} parent=1 // pred_fallthru
      _
    // Predicated region
    $region42: #{net_forward.1} parent=1 // pred_check
      _
    $region43: #{net_forward.1} parent=1 // pred_check_branch
      %75 = sbr.rel (0) target = $region45
    $region44: #{net_forward.1} parent=1 // pred_region
      _
    $region45: #{net_forward.1} parent=1 // pred_fallthru
      _
    // Predicated region
    $region46: #{net_forward.1} parent=1 // pred_check
      _
    $region47: #{net_forward.1} parent=1 // pred_check_branch
      %77 = sbr.rel (0) target = $region49
    $region48: #{net_forward.1} parent=1 // pred_region
      _
    $region49: #{net_forward.1} parent=1 // pred_fallthru
      _
    // Predicated region
    $region50: #{net_forward.1} parent=1 // pred_check
      _
    $region51: #{net_forward.1} parent=1 // pred_check_branch
      %79 = sbr.rel (0) target = $region53
    $region52: #{net_forward.1} parent=1 // pred_region
      _
    $region53: #{net_forward.1} parent=1 // pred_fallthru
      _
    // Predicated region
    $region54: #{net_forward.1} parent=1 // pred_check
      _
    $region55: #{net_forward.1} parent=1 // pred_check_branch
      %81 = sbr.rel (0) target = $region57
    $region56: #{net_forward.1} parent=1 // pred_region
      %83 = dma.done [#allocation3], 5120
    $region57: #{net_forward.1} parent=1 // pred_fallthru
      _
    // Predicated region
    $region58: #{net_forward.1} parent=1 // pred_check
      _
    $region59: #{net_forward.1} parent=1 // pred_check_branch
      %85 = sbr.rel (0) target = $region61
    $region60: #{net_forward.1} parent=1 // pred_region
      %87 = dma.done [#allocation6], 4608
    $region61: #{net_forward.1} parent=1 // pred_fallthru
      _
    // Predicated region
    $region62: #{net_forward.1} parent=1 // pred_check
      _
    $region63: #{net_forward.1} parent=1 // pred_check_branch
      %89 = sbr.rel (0) target = $region65
    $region64: #{net_forward.1} parent=1 // pred_region
      %91 = dma.done [#allocation6], 4096
    $region65: #{net_forward.1} parent=1 // pred_fallthru
      _
    %v92 = vld [vmem:[%s0] sm:$0xff]
    %v93 = vld [vmem:[%s0 + $0x8] sm:$0xff]
    %v94 = vld [vmem:[%s0 + $0x10] sm:$0xff]
    %v95 = vld [vmem:[%s0 + $0x18] sm:$0xf]
    %v96 = vld [vmem:[#allocation2] sm:$0xff]
    %v97 = vld [vmem:[#allocation2 + $0x8] sm:$0xff]
    %v98 = vld [vmem:[#allocation2 + $0x10] sm:$0xff]
    %v99 = vld [vmem:[#allocation2 + $0x18] sm:$0xff]
    %v100 = vld [vmem:[#allocation2 + $0x20] sm:$0xff]
    %v101 = vld [vmem:[#allocation2 + $0x28] sm:$0xff]
    %v102 = vld [vmem:[#allocation2 + $0x30] sm:$0xf]
    %v103 = vld [vmem:[#allocation2 + $0x38] sm:$0xf]
    %s104 = scalar_lea.vmem [#allocation2], 64
    %v105 = vld [vmem:[%s104] sm:$0xff]
    %v106 = vld [vmem:[%s104 + $0x8] sm:$0xff]
    %v107 = vld [vmem:[%s104 + $0x10] sm:$0xff]
    %v108 = vld [vmem:[%s104 + $0x18] sm:$0xff]
    %v109 = vld [vmem:[%s104 + $0x20] sm:$0xff]
    %v110 = vld [vmem:[%s104 + $0x28] sm:$0xff]
    %v111 = vld [vmem:[%s104 + $0x30] sm:$0xf]
    %v112 = vld [vmem:[%s104 + $0x38] sm:$0xf]
    %vm117 = vcmask 1046528
    %v118 = vrot.slane %v92, 1
    %v119 = vrot.slane %v93, 1
    %v120 = vsel %vm117, %v118, %v119
    %v121 = vrot.slane %v94, 1
    %v122 = vsel %vm117, %v119, %v121
    %v123 = vrot.slane %v95, 1
    %v124 = vsel %vm117, %v121, %v123
    %vm125 = vcmask 228352
    %v126 = vsel %vm125, %v120, 0
    %v128 = vsel %vm125, %v122, 0
    %v130 = vsel %vm125, %v124, 0
    %vm132 = vcmask 1043456
    %v134 = vsel %vm132, %v111, 0
    %v137 = vsel %vm132, %v112, 0
    %139 = vmatpush.msra.mxu0 0.0
    %140 = vmatpush.msra.mxu0 0.0
    %141 = vmatpush.msra.mxu0 0.0
    %142 = vmatpush.msra.mxu0 0.0
    %143 = vmatpush.msra.mxu0 0.0
    %144 = vmatpush.msra.mxu0 0.0
    %145 = vmatpush.msra.mxu0 0.0
    %146 = vmatpush.msra.mxu0 0.0
    %147 = vmatpush.msra.mxu0 0.0
    %148 = vmatpush.msra.mxu0 0.0
    %149 = vmatpush.msra.mxu0 0.0
    %150 = vmatpush.msra.mxu0 0.0
    %151 = vmatpush.msra.mxu0 %v134
    %152 = vmatpush.msra.mxu0 %v109
    %153 = vmatpush.msra.mxu0 %v107
    %154 = vmatpush.msra.mxu0 %v105
    %155 = vmatmul.f32.gmra.mxu0 %v126
    %v156 = vpop.f32.mrf.mxu0
    %v157 = vadd.f32 0.0, %v156
    %158 = vmatmul.f32.gmra.mxu0 %v128
    %v159 = vpop.f32.mrf.mxu0
    %v160 = vadd.f32 0.0, %v159
    %161 = vmatmul.f32.gmra.mxu0 %v130
    %v162 = vpop.f32.mrf.mxu0
    %v163 = vadd.f32 0.0, %v162
    %164 = vdwg.mxu0
    %165 = vmatpush.msra.mxu0 0.0
    %166 = vmatpush.msra.mxu0 0.0
    %167 = vmatpush.msra.mxu0 0.0
    %168 = vmatpush.msra.mxu0 0.0
    %169 = vmatpush.msra.mxu0 0.0
    %170 = vmatpush.msra.mxu0 0.0
    %171 = vmatpush.msra.mxu0 0.0
    %172 = vmatpush.msra.mxu0 0.0
    %173 = vmatpush.msra.mxu0 0.0
    %174 = vmatpush.msra.mxu0 0.0
    %175 = vmatpush.msra.mxu0 0.0
    %176 = vmatpush.msra.mxu0 0.0
    %177 = vmatpush.msra.mxu0 %v137
    %178 = vmatpush.msra.mxu0 %v110
    %179 = vmatpush.msra.mxu0 %v108
    %180 = vmatpush.msra.mxu0 %v106
    %181 = vmatmul.f32.gmra.mxu0 %v126
    %v182 = vpop.f32.mrf.mxu0
    %v183 = vadd.f32 0.0, %v182
    %184 = vmatmul.f32.gmra.mxu0 %v128
    %v185 = vpop.f32.mrf.mxu0
    %v186 = vadd.f32 0.0, %v185
    %187 = vmatmul.f32.gmra.mxu0 %v130
    %v188 = vpop.f32.mrf.mxu0
    %v189 = vadd.f32 0.0, %v188
    %190 = vdwg.mxu0
    %v191 = vsel %vm125, %v92, 0
    %v193 = vsel %vm125, %v93, 0
    %v195 = vsel %vm125, %v94, 0
    %v198 = vsel %vm132, %v102, 0
    %v201 = vsel %vm132, %v103, 0
    %203 = vmatpush.msra.mxu0 0.0
    %204 = vmatpush.msra.mxu0 0.0
    %205 = vmatpush.msra.mxu0 0.0
    %206 = vmatpush.msra.mxu0 0.0
    %207 = vmatpush.msra.mxu0 0.0
    %208 = vmatpush.msra.mxu0 0.0
    %209 = vmatpush.msra.mxu0 0.0
    %210 = vmatpush.msra.mxu0 0.0
    %211 = vmatpush.msra.mxu0 0.0
    %212 = vmatpush.msra.mxu0 0.0
    %213 = vmatpush.msra.mxu0 0.0
    %214 = vmatpush.msra.mxu0 0.0
    %215 = vmatpush.msra.mxu0 %v198
    %216 = vmatpush.msra.mxu0 %v100
    %217 = vmatpush.msra.mxu0 %v98
    %218 = vmatpush.msra.mxu0 %v96
    %219 = vmatmul.f32.gmra.mxu0 %v191
    %v220 = vpop.f32.mrf.mxu0
    %v221 = vadd.f32 %v157, %v220
    %222 = vmatmul.f32.gmra.mxu0 %v193
    %v223 = vpop.f32.mrf.mxu0
    %v224 = vadd.f32 %v160, %v223
    %225 = vmatmul.f32.gmra.mxu0 %v195
    %v226 = vpop.f32.mrf.mxu0
    %v227 = vadd.f32 %v163, %v226
    %228 = vdwg.mxu0
    %229 = vmatpush.msra.mxu0 0.0
    %230 = vmatpush.msra.mxu0 0.0
    %231 = vmatpush.msra.mxu0 0.0
    %232 = vmatpush.msra.mxu0 0.0
    %233 = vmatpush.msra.mxu0 0.0
    %234 = vmatpush.msra.mxu0 0.0
    %235 = vmatpush.msra.mxu0 0.0
    %236 = vmatpush.msra.mxu0 0.0
    %237 = vmatpush.msra.mxu0 0.0
    %238 = vmatpush.msra.mxu0 0.0
    %239 = vmatpush.msra.mxu0 0.0
    %240 = vmatpush.msra.mxu0 0.0
    %241 = vmatpush.msra.mxu0 %v201
    %242 = vmatpush.msra.mxu0 %v101
    %243 = vmatpush.msra.mxu0 %v99
    %244 = vmatpush.msra.mxu0 %v97
    %245 = vmatmul.f32.gmra.mxu0 %v191
    %v246 = vpop.f32.mrf.mxu0
    %v247 = vadd.f32 %v183, %v246
    %248 = vmatmul.f32.gmra.mxu0 %v193
    %v249 = vpop.f32.mrf.mxu0
    %v250 = vadd.f32 %v186, %v249
    %251 = vmatmul.f32.gmra.mxu0 %v195
    %v252 = vpop.f32.mrf.mxu0
    %v253 = vadd.f32 %v189, %v252
    %254 = vdwg.mxu0
    %s255 = scalar_lea.vmem [#allocation2], 128
    %v256 = vld [vmem:[%s255] sm:$0xff]
    %v257 = vld [vmem:[%s255 + $0x8] sm:$0xff]
    %v258 = vld [vmem:[%s255 + $0x10] sm:$0xff]
    %v259 = vld [vmem:[%s255 + $0x18] sm:$0xff]
    %v260 = vld [vmem:[%s255 + $0x20] sm:$0xff]
    %v261 = vld [vmem:[%s255 + $0x28] sm:$0xff]
    %v262 = vld [vmem:[%s255 + $0x30] sm:$0xf]
    %v263 = vld [vmem:[%s255 + $0x38] sm:$0xf]
    %vm264 = vcmask 1045504
    %v265 = vrot.slane %v92, 2
    %v266 = vrot.slane %v93, 2
    %v267 = vsel %vm264, %v265, %v266
    %v268 = vrot.slane %v94, 2
    %v269 = vsel %vm264, %v266, %v268
    %v270 = vrot.slane %v95, 2
    %v271 = vsel %vm264, %v268, %v270
    %v272 = vsel %vm125, %v267, 0
    %v274 = vsel %vm125, %v269, 0
    %v276 = vsel %vm125, %v271, 0
    %v279 = vsel %vm132, %v262, 0
    %v282 = vsel %vm132, %v263, 0
    %284 = vmatpush.msra.mxu0 0.0
    %285 = vmatpush.msra.mxu0 0.0
    %286 = vmatpush.msra.mxu0 0.0
    %287 = vmatpush.msra.mxu0 0.0
    %288 = vmatpush.msra.mxu0 0.0
    %289 = vmatpush.msra.mxu0 0.0
    %290 = vmatpush.msra.mxu0 0.0
    %291 = vmatpush.msra.mxu0 0.0
    %292 = vmatpush.msra.mxu0 0.0
    %293 = vmatpush.msra.mxu0 0.0
    %294 = vmatpush.msra.mxu0 0.0
    %295 = vmatpush.msra.mxu0 0.0
    %296 = vmatpush.msra.mxu0 %v279
    %297 = vmatpush.msra.mxu0 %v260
    %298 = vmatpush.msra.mxu0 %v258
    %299 = vmatpush.msra.mxu0 %v256
    %300 = vmatmul.f32.gmra.mxu0 %v272
    %v301 = vpop.f32.mrf.mxu0
    %v302 = vadd.f32 0.0, %v301
    %303 = vmatmul.f32.gmra.mxu0 %v274
    %v304 = vpop.f32.mrf.mxu0
    %v305 = vadd.f32 0.0, %v304
    %306 = vmatmul.f32.gmra.mxu0 %v276
    %v307 = vpop.f32.mrf.mxu0
    %v308 = vadd.f32 0.0, %v307
    %309 = vdwg.mxu0
    %310 = vmatpush.msra.mxu0 0.0
    %311 = vmatpush.msra.mxu0 0.0
    %312 = vmatpush.msra.mxu0 0.0
    %313 = vmatpush.msra.mxu0 0.0
    %314 = vmatpush.msra.mxu0 0.0
    %315 = vmatpush.msra.mxu0 0.0
    %316 = vmatpush.msra.mxu0 0.0
    %317 = vmatpush.msra.mxu0 0.0
    %318 = vmatpush.msra.mxu0 0.0
    %319 = vmatpush.msra.mxu0 0.0
    %320 = vmatpush.msra.mxu0 0.0
    %321 = vmatpush.msra.mxu0 0.0
    %322 = vmatpush.msra.mxu0 %v282
    %323 = vmatpush.msra.mxu0 %v261
    %324 = vmatpush.msra.mxu0 %v259
    %325 = vmatpush.msra.mxu0 %v257
    %326 = vmatmul.f32.gmra.mxu0 %v272
    %v327 = vpop.f32.mrf.mxu0
    %v328 = vadd.f32 0.0, %v327
    %329 = vmatmul.f32.gmra.mxu0 %v274
    %v330 = vpop.f32.mrf.mxu0
    %v331 = vadd.f32 0.0, %v330
    %332 = vmatmul.f32.gmra.mxu0 %v276
    %v333 = vpop.f32.mrf.mxu0
    %v334 = vadd.f32 0.0, %v333
    %335 = vdwg.mxu0
    %v336 = vadd.f32 %v221, %v302
    %v337 = vadd.f32 %v247, %v328
    %v338 = vadd.f32 %v224, %v305
    %v339 = vadd.f32 %v250, %v331
    %v340 = vadd.f32 %v227, %v308
    %v341 = vadd.f32 %v253, %v334
    %s342 = scalar_lea.vmem [#allocation2], 192
    %v343 = vld [vmem:[%s342] sm:$0xff]
    %v344 = vld [vmem:[%s342 + $0x8] sm:$0xff]
    %v345 = vld [vmem:[%s342 + $0x10] sm:$0xff]
    %v346 = vld [vmem:[%s342 + $0x18] sm:$0xff]
    %v347 = vld [vmem:[%s342 + $0x20] sm:$0xff]
    %v348 = vld [vmem:[%s342 + $0x28] sm:$0xff]
    %v349 = vld [vmem:[%s342 + $0x30] sm:$0xf]
    %v350 = vld [vmem:[%s342 + $0x38] sm:$0xf]
    %vm351 = vcmask 1044480
    %v352 = vrot.slane %v92, 3
    %v353 = vrot.slane %v93, 3
    %v354 = vsel %vm351, %v352, %v353
    %v355 = vrot.slane %v94, 3
    %v356 = vsel %vm351, %v353, %v355
    %v357 = vrot.slane %v95, 3
    %v358 = vsel %vm351, %v355, %v357
    %v359 = vsel %vm125, %v354, 0
    %v361 = vsel %vm125, %v356, 0
    %v363 = vsel %vm125, %v358, 0
    %v366 = vsel %vm132, %v349, 0
    %v369 = vsel %vm132, %v350, 0
    %371 = vmatpush.msra.mxu0 0.0
    %372 = vmatpush.msra.mxu0 0.0
    %373 = vmatpush.msra.mxu0 0.0
    %374 = vmatpush.msra.mxu0 0.0
    %375 = vmatpush.msra.mxu0 0.0
    %376 = vmatpush.msra.mxu0 0.0
    %377 = vmatpush.msra.mxu0 0.0
    %378 = vmatpush.msra.mxu0 0.0
    %379 = vmatpush.msra.mxu0 0.0
    %380 = vmatpush.msra.mxu0 0.0
    %381 = vmatpush.msra.mxu0 0.0
    %382 = vmatpush.msra.mxu0 0.0
    %383 = vmatpush.msra.mxu0 %v366
    %384 = vmatpush.msra.mxu0 %v347
    %385 = vmatpush.msra.mxu0 %v345
    %386 = vmatpush.msra.mxu0 %v343
    %387 = vmatmul.f32.gmra.mxu0 %v359
    %v388 = vpop.f32.mrf.mxu0
    %v389 = vadd.f32 0.0, %v388
    %390 = vmatmul.f32.gmra.mxu0 %v361
    %v391 = vpop.f32.mrf.mxu0
    %v392 = vadd.f32 0.0, %v391
    %393 = vmatmul.f32.gmra.mxu0 %v363
    %v394 = vpop.f32.mrf.mxu0
    %v395 = vadd.f32 0.0, %v394
    %396 = vdwg.mxu0
    %397 = vmatpush.msra.mxu0 0.0
    %398 = vmatpush.msra.mxu0 0.0
    %399 = vmatpush.msra.mxu0 0.0
    %400 = vmatpush.msra.mxu0 0.0
    %401 = vmatpush.msra.mxu0 0.0
    %402 = vmatpush.msra.mxu0 0.0
    %403 = vmatpush.msra.mxu0 0.0
    %404 = vmatpush.msra.mxu0 0.0
    %405 = vmatpush.msra.mxu0 0.0
    %406 = vmatpush.msra.mxu0 0.0
    %407 = vmatpush.msra.mxu0 0.0
    %408 = vmatpush.msra.mxu0 0.0
    %409 = vmatpush.msra.mxu0 %v369
    %410 = vmatpush.msra.mxu0 %v348
    %411 = vmatpush.msra.mxu0 %v346
    %412 = vmatpush.msra.mxu0 %v344
    %413 = vmatmul.f32.gmra.mxu0 %v359
    %v414 = vpop.f32.mrf.mxu0
    %v415 = vadd.f32 0.0, %v414
    %416 = vmatmul.f32.gmra.mxu0 %v361
    %v417 = vpop.f32.mrf.mxu0
    %v418 = vadd.f32 0.0, %v417
    %419 = vmatmul.f32.gmra.mxu0 %v363
    %v420 = vpop.f32.mrf.mxu0
    %v421 = vadd.f32 0.0, %v420
    %422 = vdwg.mxu0
    %v423 = vadd.f32 %v336, %v389
    %v424 = vadd.f32 %v337, %v415
    %v425 = vadd.f32 %v338, %v392
    %v426 = vadd.f32 %v339, %v418
    %v427 = vadd.f32 %v340, %v395
    %v428 = vadd.f32 %v341, %v421
    %s429 = scalar_lea.vmem [#allocation2], 256
    %v430 = vld [vmem:[%s429] sm:$0xff]
    %v431 = vld [vmem:[%s429 + $0x8] sm:$0xff]
    %v432 = vld [vmem:[%s429 + $0x10] sm:$0xff]
    %v433 = vld [vmem:[%s429 + $0x18] sm:$0xff]
    %v434 = vld [vmem:[%s429 + $0x20] sm:$0xff]
    %v435 = vld [vmem:[%s429 + $0x28] sm:$0xff]
    %v436 = vld [vmem:[%s429 + $0x30] sm:$0xf]
    %v437 = vld [vmem:[%s429 + $0x38] sm:$0xf]
    %v438 = vrot.slane %v92, 4
    %v439 = vrot.slane %v93, 4
    %v440 = vsel %vm132, %v438, %v439
    %v441 = vrot.slane %v94, 4
    %v442 = vsel %vm132, %v439, %v441
    %v443 = vrot.slane %v95, 4
    %v444 = vsel %vm132, %v441, %v443
    %v445 = vsel %vm125, %v440, 0
    %v447 = vsel %vm125, %v442, 0
    %v449 = vsel %vm125, %v444, 0
    %v452 = vsel %vm132, %v436, 0
    %v455 = vsel %vm132, %v437, 0
    %457 = vmatpush.msra.mxu0 0.0
    %458 = vmatpush.msra.mxu0 0.0
    %459 = vmatpush.msra.mxu0 0.0
    %460 = vmatpush.msra.mxu0 0.0
    %461 = vmatpush.msra.mxu0 0.0
    %462 = vmatpush.msra.mxu0 0.0
    %463 = vmatpush.msra.mxu0 0.0
    %464 = vmatpush.msra.mxu0 0.0
    %465 = vmatpush.msra.mxu0 0.0
    %466 = vmatpush.msra.mxu0 0.0
    %467 = vmatpush.msra.mxu0 0.0
    %468 = vmatpush.msra.mxu0 0.0
    %469 = vmatpush.msra.mxu0 %v452
    %470 = vmatpush.msra.mxu0 %v434
    %471 = vmatpush.msra.mxu0 %v432
    %472 = vmatpush.msra.mxu0 %v430
    %473 = vmatmul.f32.gmra.mxu0 %v445
    %v474 = vpop.f32.mrf.mxu0
    %v475 = vadd.f32 0.0, %v474
    %476 = vmatmul.f32.gmra.mxu0 %v447
    %v477 = vpop.f32.mrf.mxu0
    %v478 = vadd.f32 0.0, %v477
    %479 = vmatmul.f32.gmra.mxu0 %v449
    %v480 = vpop.f32.mrf.mxu0
    %v481 = vadd.f32 0.0, %v480
    %482 = vdwg.mxu0
    %483 = vmatpush.msra.mxu0 0.0
    %484 = vmatpush.msra.mxu0 0.0
    %485 = vmatpush.msra.mxu0 0.0
    %486 = vmatpush.msra.mxu0 0.0
    %487 = vmatpush.msra.mxu0 0.0
    %488 = vmatpush.msra.mxu0 0.0
    %489 = vmatpush.msra.mxu0 0.0
    %490 = vmatpush.msra.mxu0 0.0
    %491 = vmatpush.msra.mxu0 0.0
    %492 = vmatpush.msra.mxu0 0.0
    %493 = vmatpush.msra.mxu0 0.0
    %494 = vmatpush.msra.mxu0 0.0
    %495 = vmatpush.msra.mxu0 %v455
    %496 = vmatpush.msra.mxu0 %v435
    %497 = vmatpush.msra.mxu0 %v433
    %498 = vmatpush.msra.mxu0 %v431
    %499 = vmatmul.f32.gmra.mxu0 %v445
    %v500 = vpop.f32.mrf.mxu0
    %v501 = vadd.f32 0.0, %v500
    %502 = vmatmul.f32.gmra.mxu0 %v447
    %v503 = vpop.f32.mrf.mxu0
    %v504 = vadd.f32 0.0, %v503
    %505 = vmatmul.f32.gmra.mxu0 %v449
    %v506 = vpop.f32.mrf.mxu0
    %v507 = vadd.f32 0.0, %v506
    %508 = vdwg.mxu0
    %v509 = vadd.f32 %v423, %v475
    %v510 = vadd.f32 %v424, %v501
    %v511 = vadd.f32 %v425, %v478
    %v512 = vadd.f32 %v426, %v504
    %v513 = vadd.f32 %v427, %v481
    %v514 = vadd.f32 %v428, %v507
    %v515 = vld [vmem:[#allocation5] sm:$0xff]
    %v516 = vld [vmem:[#allocation5 + $0x8] sm:$0xff]
    %v517 = vld [vmem:[#allocation5 + $0x10] sm:$0xff]
    %v518 = vld [vmem:[#allocation5 + $0x18] sm:$0xff]
    %v519 = vld [vmem:[#allocation5 + $0x20] sm:$0xff]
    %v520 = vld [vmem:[#allocation5 + $0x28] sm:$0xff]
    %v521 = vld [vmem:[#allocation5 + $0x30] sm:$0xff]
    %v522 = vld [vmem:[#allocation5 + $0x38] sm:$0xff]
    %v523 = vld [vmem:[#allocation5 + $0x40] sm:$0xff]
    %v524 = vld [vmem:[#allocation5 + $0x48] sm:$0xff]
    %v525 = vld [vmem:[#allocation5 + $0x50] sm:$0xff]
    %v526 = vld [vmem:[#allocation5 + $0x58] sm:$0xff]
    %v527 = vld [vmem:[#allocation5 + $0x60] sm:$0xff]
    %v528 = vld [vmem:[#allocation5 + $0x68] sm:$0xff]
    %v529 = vld [vmem:[#allocation5 + $0x70] sm:$0xff]
    %v530 = vld [vmem:[#allocation5 + $0x78] sm:$0xff]
    %v531 = vld [vmem:[#allocation5 + $0x80] sm:$0xff]
    %v532 = vld [vmem:[#allocation5 + $0x88] sm:$0xff]
    %vm533 = vcmask 130048
    %v535 = vsel %vm533, %v510, 0
    %v538 = vsel %vm533, %v512, 0
    %v541 = vsel %vm533, %v514, 0
    %543 = vmatpush.msra.mxu0 %v530
    %544 = vmatpush.msra.mxu0 %v529
    %545 = vmatpush.msra.mxu0 %v528
    %546 = vmatpush.msra.mxu0 %v527
    %547 = vmatpush.msra.mxu0 %v526
    %548 = vmatpush.msra.mxu0 %v525
    %549 = vmatpush.msra.mxu0 %v524
    %550 = vmatpush.msra.mxu0 %v523
    %551 = vmatpush.msra.mxu0 %v522
    %552 = vmatpush.msra.mxu0 %v521
    %553 = vmatpush.msra.mxu0 %v520
    %554 = vmatpush.msra.mxu0 %v519
    %555 = vmatpush.msra.mxu0 %v518
    %556 = vmatpush.msra.mxu0 %v517
    %557 = vmatpush.msra.mxu0 %v516
    %558 = vmatpush.msra.mxu0 %v515
    %559 = vmatmul.f32.gmra.mxu0 %v509
    %v560 = vpop.f32.mrf.mxu0
    %v561 = vadd.f32 0.0, %v560
    %562 = vmatmul.f32.gmra.mxu0 %v511
    %v563 = vpop.f32.mrf.mxu0
    %v564 = vadd.f32 0.0, %v563
    %565 = vmatmul.f32.gmra.mxu0 %v513
    %v566 = vpop.f32.mrf.mxu0
    %v567 = vadd.f32 0.0, %v566
    %568 = vdwg.mxu0
    %569 = vmatpush.msra.mxu0 0.0
    %570 = vmatpush.msra.mxu0 0.0
    %571 = vmatpush.msra.mxu0 0.0
    %572 = vmatpush.msra.mxu0 0.0
    %573 = vmatpush.msra.mxu0 0.0
    %574 = vmatpush.msra.mxu0 0.0
    %575 = vmatpush.msra.mxu0 0.0
    %576 = vmatpush.msra.mxu0 0.0
    %577 = vmatpush.msra.mxu0 0.0
    %578 = vmatpush.msra.mxu0 0.0
    %579 = vmatpush.msra.mxu0 0.0
    %580 = vmatpush.msra.mxu0 0.0
    %581 = vmatpush.msra.mxu0 0.0
    %582 = vmatpush.msra.mxu0 0.0
    %583 = vmatpush.msra.mxu0 %v532
    %584 = vmatpush.msra.mxu0 %v531
    %585 = vmatmul.f32.gmra.mxu0 %v535
    %v586 = vpop.f32.mrf.mxu0
    %v587 = vadd.f32 %v561, %v586
    %588 = vmatmul.f32.gmra.mxu0 %v538
    %v589 = vpop.f32.mrf.mxu0
    %v590 = vadd.f32 %v564, %v589
    %591 = vmatmul.f32.gmra.mxu0 %v541
    %v592 = vpop.f32.mrf.mxu0
    %v593 = vadd.f32 %v567, %v592
    %594 = vdwg.mxu0
    %s595 = scalar_lea.vmem [#allocation5], 144
    %v596 = vld [vmem:[%s595] sm:$0xff]
    %v597 = vld [vmem:[%s595 + $0x8] sm:$0xff]
    %v598 = vld [vmem:[%s595 + $0x10] sm:$0xff]
    %v599 = vld [vmem:[%s595 + $0x18] sm:$0xff]
    %v600 = vld [vmem:[%s595 + $0x20] sm:$0xff]
    %v601 = vld [vmem:[%s595 + $0x28] sm:$0xff]
    %v602 = vld [vmem:[%s595 + $0x30] sm:$0xff]
    %v603 = vld [vmem:[%s595 + $0x38] sm:$0xff]
    %v604 = vld [vmem:[%s595 + $0x40] sm:$0xff]
    %v605 = vld [vmem:[%s595 + $0x48] sm:$0xff]
    %v606 = vld [vmem:[%s595 + $0x50] sm:$0xff]
    %v607 = vld [vmem:[%s595 + $0x58] sm:$0xff]
    %v608 = vld [vmem:[%s595 + $0x60] sm:$0xff]
    %v609 = vld [vmem:[%s595 + $0x68] sm:$0xff]
    %v610 = vld [vmem:[%s595 + $0x70] sm:$0xff]
    %v611 = vld [vmem:[%s595 + $0x78] sm:$0xff]
    %v612 = vld [vmem:[%s595 + $0x80] sm:$0xff]
    %v613 = vld [vmem:[%s595 + $0x88] sm:$0xff]
    %614 = vmatpush.msra.mxu0 %v611
    %615 = vmatpush.msra.mxu0 %v610
    %616 = vmatpush.msra.mxu0 %v609
    %617 = vmatpush.msra.mxu0 %v608
    %618 = vmatpush.msra.mxu0 %v607
    %619 = vmatpush.msra.mxu0 %v606
    %620 = vmatpush.msra.mxu0 %v605
    %621 = vmatpush.msra.mxu0 %v604
    %622 = vmatpush.msra.mxu0 %v603
    %623 = vmatpush.msra.mxu0 %v602
    %624 = vmatpush.msra.mxu0 %v601
    %625 = vmatpush.msra.mxu0 %v600
    %626 = vmatpush.msra.mxu0 %v599
    %627 = vmatpush.msra.mxu0 %v598
    %628 = vmatpush.msra.mxu0 %v597
    %629 = vmatpush.msra.mxu0 %v596
    %630 = vmatmul.f32.gmra.mxu0 %v509
    %v631 = vpop.f32.mrf.mxu0
    %v632 = vadd.f32 0.0, %v631
    %633 = vmatmul.f32.gmra.mxu0 %v511
    %v634 = vpop.f32.mrf.mxu0
    %v635 = vadd.f32 0.0, %v634
    %636 = vmatmul.f32.gmra.mxu0 %v513
    %v637 = vpop.f32.mrf.mxu0
    %v638 = vadd.f32 0.0, %v637
    %639 = vdwg.mxu0
    %640 = vmatpush.msra.mxu0 0.0
    %641 = vmatpush.msra.mxu0 0.0
    %642 = vmatpush.msra.mxu0 0.0
    %643 = vmatpush.msra.mxu0 0.0
    %644 = vmatpush.msra.mxu0 0.0
    %645 = vmatpush.msra.mxu0 0.0
    %646 = vmatpush.msra.mxu0 0.0
    %647 = vmatpush.msra.mxu0 0.0
    %648 = vmatpush.msra.mxu0 0.0
    %649 = vmatpush.msra.mxu0 0.0
    %650 = vmatpush.msra.mxu0 0.0
    %651 = vmatpush.msra.mxu0 0.0
    %652 = vmatpush.msra.mxu0 0.0
    %653 = vmatpush.msra.mxu0 0.0
    %654 = vmatpush.msra.mxu0 %v613
    %655 = vmatpush.msra.mxu0 %v612
    %656 = vmatmul.f32.gmra.mxu0 %v535
    %v657 = vpop.f32.mrf.mxu0
    %v658 = vadd.f32 %v632, %v657
    %659 = vmatmul.f32.gmra.mxu0 %v538
    %v660 = vpop.f32.mrf.mxu0
    %v661 = vadd.f32 %v635, %v660
    %662 = vmatmul.f32.gmra.mxu0 %v541
    %v663 = vpop.f32.mrf.mxu0
    %v664 = vadd.f32 %v638, %v663
    %665 = vdwg.mxu0
    %v666 = vmax.f32 %v587, %v658
    %v667 = vmax.f32 %v590, %v661
    %v668 = vmax.f32 %v593, %v664
    %v669 = vld [vmem:[%s3] sm:$0xff]
    %v670 = vld [vmem:[%s3 + $0x8] sm:$0xf]
    %vm671 = vcmask 195584
    %v673 = vsel %vm671, %v669, 0
    %v676 = vsel %vm671, %v670, 0
    %678 = vmatpush.msra.mxu0 0.0
    %679 = vmatpush.msra.mxu0 0.0
    %680 = vmatpush.msra.mxu0 0.0
    %681 = vmatpush.msra.mxu0 0.0
    %682 = vmatpush.msra.mxu0 0.0
    %683 = vmatpush.msra.mxu0 0.0
    %684 = vmatpush.msra.mxu0 0.0
    %685 = vmatpush.msra.mxu0 0.0
    %686 = vmatpush.msra.mxu0 0.0
    %687 = vmatpush.msra.mxu0 0.0
    %688 = vmatpush.msra.mxu0 0.0
    %689 = vmatpush.msra.mxu0 0.0
    %690 = vmatpush.msra.mxu0 0.0
    %691 = vmatpush.msra.mxu0 %v668
    %692 = vmatpush.msra.mxu0 %v667
    %693 = vmatpush.msra.mxu0 %v666
    %694 = vmatmul.f32.gmra.mxu0 %v673
    %v695 = vpop.f32.mrf.mxu0
    %v696 = vadd.f32 0.0, %v695
    %697 = vmatmul.f32.gmra.mxu0 %v676
    %v698 = vpop.f32.mrf.mxu0
    %v699 = vadd.f32 0.0, %v698
    %700 = vdwg.mxu0
    %s701 = scalar_lea.vmem %s3, 16
    %v702 = vld [vmem:[%s701] sm:$0xff]
    %v703 = vld [vmem:[%s701 + $0x8] sm:$0xf]
    %v705 = vsel %vm671, %v702, 0
    %v708 = vsel %vm671, %v703, 0
    %710 = vmatpush.msra.mxu0 0.0
    %711 = vmatpush.msra.mxu0 0.0
    %712 = vmatpush.msra.mxu0 0.0
    %713 = vmatpush.msra.mxu0 0.0
    %714 = vmatpush.msra.mxu0 0.0
    %715 = vmatpush.msra.mxu0 0.0
    %716 = vmatpush.msra.mxu0 0.0
    %717 = vmatpush.msra.mxu0 0.0
    %718 = vmatpush.msra.mxu0 0.0
    %719 = vmatpush.msra.mxu0 0.0
    %720 = vmatpush.msra.mxu0 0.0
    %721 = vmatpush.msra.mxu0 0.0
    %722 = vmatpush.msra.mxu0 0.0
    %723 = vmatpush.msra.mxu0 %v668
    %724 = vmatpush.msra.mxu0 %v667
    %725 = vmatpush.msra.mxu0 %v666
    %726 = vmatmul.f32.gmra.mxu0 %v705
    %v727 = vpop.f32.mrf.mxu0
    %v728 = vadd.f32 0.0, %v727
    %729 = vmatmul.f32.gmra.mxu0 %v708
    %v730 = vpop.f32.mrf.mxu0
    %v731 = vadd.f32 0.0, %v730
    %732 = vdwg.mxu0
    %v733 = vmax.f32 %v696, %v728
    %v734 = vmax.f32 %v699, %v731
    %v735 = vld [vmem:[%s4] sm:$0x1]
    %v737 = vperm.slane %v735, 0
    %v739 = vadd.f32 %v733, %v737
    %v740 = vadd.f32 %v734, %v737
    %v741 = vmax.f32 %v739, 0.0
    %v742 = vmax.f32 %v740, 0.0
    %v743 = vld [vmem:[%s5] sm:$0xff]
    %v744 = vld [vmem:[%s5 + $0x8] sm:$0xff]
    %v745 = vld [vmem:[%s5 + $0x10] sm:$0xff]
    %v746 = vld [vmem:[%s5 + $0x18] sm:$0xff]
    %v747 = vld [vmem:[%s5 + $0x20] sm:$0xff]
    %v748 = vld [vmem:[%s5 + $0x28] sm:$0xff]
    %v749 = vld [vmem:[%s5 + $0x30] sm:$0xff]
    %v750 = vld [vmem:[%s5 + $0x38] sm:$0xff]
    %v751 = vld [vmem:[%s5 + $0x40] sm:$0xff]
    %s752 = scalar_lea.vmem %s5, 72
    %v753 = vld [vmem:[%s752] sm:$0xff]
    %v754 = vld [vmem:[%s752 + $0x8] sm:$0xff]
    %v755 = vld [vmem:[%s752 + $0x10] sm:$0xff]
    %v756 = vld [vmem:[%s752 + $0x18] sm:$0xff]
    %v757 = vld [vmem:[%s752 + $0x20] sm:$0xff]
    %v758 = vld [vmem:[%s752 + $0x28] sm:$0xff]
    %v759 = vld [vmem:[%s752 + $0x30] sm:$0xff]
    %v760 = vld [vmem:[%s752 + $0x38] sm:$0xff]
    %v761 = vld [vmem:[%s752 + $0x40] sm:$0xff]
    %v764 = vrot.slane %v741, 1
    %v765 = vrot.slane %v742, 1
    %v766 = vsel %vm117, %v764, %v765
    %vm767 = vcmask 588800
    %v768 = vsel %vm767, %v766, 0
    %770 = vmatpush.msra.mxu0 0.0
    %771 = vmatpush.msra.mxu0 0.0
    %772 = vmatpush.msra.mxu0 0.0
    %773 = vmatpush.msra.mxu0 0.0
    %774 = vmatpush.msra.mxu0 0.0
    %775 = vmatpush.msra.mxu0 0.0
    %776 = vmatpush.msra.mxu0 0.0
    %777 = vmatpush.msra.mxu0 %v761
    %778 = vmatpush.msra.mxu0 %v760
    %779 = vmatpush.msra.mxu0 %v759
    %780 = vmatpush.msra.mxu0 %v758
    %781 = vmatpush.msra.mxu0 %v757
    %782 = vmatpush.msra.mxu0 %v756
    %783 = vmatpush.msra.mxu0 %v755
    %784 = vmatpush.msra.mxu0 %v754
    %785 = vmatpush.msra.mxu0 %v753
    %786 = vmatmul.f32.gmra.mxu0 %v768
    %v787 = vpop.f32.mrf.mxu0
    %v788 = vadd.f32 0.0, %v787
    %789 = vdwg.mxu0
    %v790 = vsel %vm767, %v741, 0
    %792 = vmatpush.msra.mxu0 0.0
    %793 = vmatpush.msra.mxu0 0.0
    %794 = vmatpush.msra.mxu0 0.0
    %795 = vmatpush.msra.mxu0 0.0
    %796 = vmatpush.msra.mxu0 0.0
    %797 = vmatpush.msra.mxu0 0.0
    %798 = vmatpush.msra.mxu0 0.0
    %799 = vmatpush.msra.mxu0 %v751
    %800 = vmatpush.msra.mxu0 %v750
    %801 = vmatpush.msra.mxu0 %v749
    %802 = vmatpush.msra.mxu0 %v748
    %803 = vmatpush.msra.mxu0 %v747
    %804 = vmatpush.msra.mxu0 %v746
    %805 = vmatpush.msra.mxu0 %v745
    %806 = vmatpush.msra.mxu0 %v744
    %807 = vmatpush.msra.mxu0 %v743
    %808 = vmatmul.f32.gmra.mxu0 %v790
    %v809 = vpop.f32.mrf.mxu0
    %v810 = vadd.f32 %v788, %v809
    %811 = vdwg.mxu0
    %s812 = scalar_lea.vmem %s5, 144
    %v813 = vld [vmem:[%s812] sm:$0xff]
    %v814 = vld [vmem:[%s812 + $0x8] sm:$0xff]
    %v815 = vld [vmem:[%s812 + $0x10] sm:$0xff]
    %v816 = vld [vmem:[%s812 + $0x18] sm:$0xff]
    %v817 = vld [vmem:[%s812 + $0x20] sm:$0xff]
    %v818 = vld [vmem:[%s812 + $0x28] sm:$0xff]
    %v819 = vld [vmem:[%s812 + $0x30] sm:$0xff]
    %v820 = vld [vmem:[%s812 + $0x38] sm:$0xff]
    %v821 = vld [vmem:[%s812 + $0x40] sm:$0xff]
    %v822 = vrot.slane %v741, 2
    %v823 = vrot.slane %v742, 2
    %v824 = vsel %vm264, %v822, %v823
    %v825 = vsel %vm767, %v824, 0
    %827 = vmatpush.msra.mxu0 0.0
    %828 = vmatpush.msra.mxu0 0.0
    %829 = vmatpush.msra.mxu0 0.0
    %830 = vmatpush.msra.mxu0 0.0
    %831 = vmatpush.msra.mxu0 0.0
    %832 = vmatpush.msra.mxu0 0.0
    %833 = vmatpush.msra.mxu0 0.0
    %834 = vmatpush.msra.mxu0 %v821
    %835 = vmatpush.msra.mxu0 %v820
    %836 = vmatpush.msra.mxu0 %v819
    %837 = vmatpush.msra.mxu0 %v818
    %838 = vmatpush.msra.mxu0 %v817
    %839 = vmatpush.msra.mxu0 %v816
    %840 = vmatpush.msra.mxu0 %v815
    %841 = vmatpush.msra.mxu0 %v814
    %842 = vmatpush.msra.mxu0 %v813
    %843 = vmatmul.f32.gmra.mxu0 %v825
    %v844 = vpop.f32.mrf.mxu0
    %v845 = vadd.f32 0.0, %v844
    %846 = vdwg.mxu0
    %v847 = vadd.f32 %v810, %v845
    %s848 = scalar_lea.vmem %s5, 216
    %v849 = vld [vmem:[%s848] sm:$0xff]
    %v850 = vld [vmem:[%s848 + $0x8] sm:$0xff]
    %v851 = vld [vmem:[%s848 + $0x10] sm:$0xff]
    %v852 = vld [vmem:[%s848 + $0x18] sm:$0xff]
    %v853 = vld [vmem:[%s848 + $0x20] sm:$0xff]
    %v854 = vld [vmem:[%s848 + $0x28] sm:$0xff]
    %v855 = vld [vmem:[%s848 + $0x30] sm:$0xff]
    %v856 = vld [vmem:[%s848 + $0x38] sm:$0xff]
    %v857 = vld [vmem:[%s848 + $0x40] sm:$0xff]
    %v858 = vrot.slane %v741, 3
    %v859 = vrot.slane %v742, 3
    %v860 = vsel %vm351, %v858, %v859
    %v861 = vsel %vm767, %v860, 0
    %863 = vmatpush.msra.mxu0 0.0
    %864 = vmatpush.msra.mxu0 0.0
    %865 = vmatpush.msra.mxu0 0.0
    %866 = vmatpush.msra.mxu0 0.0
    %867 = vmatpush.msra.mxu0 0.0
    %868 = vmatpush.msra.mxu0 0.0
    %869 = vmatpush.msra.mxu0 0.0
    %870 = vmatpush.msra.mxu0 %v857
    %871 = vmatpush.msra.mxu0 %v856
    %872 = vmatpush.msra.mxu0 %v855
    %873 = vmatpush.msra.mxu0 %v854
    %874 = vmatpush.msra.mxu0 %v853
    %875 = vmatpush.msra.mxu0 %v852
    %876 = vmatpush.msra.mxu0 %v851
    %877 = vmatpush.msra.mxu0 %v850
    %878 = vmatpush.msra.mxu0 %v849
    %879 = vmatmul.f32.gmra.mxu0 %v861
    %v880 = vpop.f32.mrf.mxu0
    %v881 = vadd.f32 0.0, %v880
    %882 = vdwg.mxu0
    %v883 = vadd.f32 %v847, %v881
    %s884 = scalar_lea.vmem %s5, 288
    %v885 = vld [vmem:[%s884] sm:$0xff]
    %v886 = vld [vmem:[%s884 + $0x8] sm:$0xff]
    %v887 = vld [vmem:[%s884 + $0x10] sm:$0xff]
    %v888 = vld [vmem:[%s884 + $0x18] sm:$0xff]
    %v889 = vld [vmem:[%s884 + $0x20] sm:$0xff]
    %v890 = vld [vmem:[%s884 + $0x28] sm:$0xff]
    %v891 = vld [vmem:[%s884 + $0x30] sm:$0xff]
    %v892 = vld [vmem:[%s884 + $0x38] sm:$0xff]
    %v893 = vld [vmem:[%s884 + $0x40] sm:$0xff]
    %v894 = vrot.slane %v741, 4
    %v895 = vrot.slane %v742, 4
    %v896 = vsel %vm132, %v894, %v895
    %v897 = vsel %vm767, %v896, 0
    %899 = vmatpush.msra.mxu0 0.0
    %900 = vmatpush.msra.mxu0 0.0
    %901 = vmatpush.msra.mxu0 0.0
    %902 = vmatpush.msra.mxu0 0.0
    %903 = vmatpush.msra.mxu0 0.0
    %904 = vmatpush.msra.mxu0 0.0
    %905 = vmatpush.msra.mxu0 0.0
    %906 = vmatpush.msra.mxu0 %v893
    %907 = vmatpush.msra.mxu0 %v892
    %908 = vmatpush.msra.mxu0 %v891
    %909 = vmatpush.msra.mxu0 %v890
    %910 = vmatpush.msra.mxu0 %v889
    %911 = vmatpush.msra.mxu0 %v888
    %912 = vmatpush.msra.mxu0 %v887
    %913 = vmatpush.msra.mxu0 %v886
    %914 = vmatpush.msra.mxu0 %v885
    %915 = vmatmul.f32.gmra.mxu0 %v897
    %v916 = vpop.f32.mrf.mxu0
    %v917 = vadd.f32 0.0, %v916
    %918 = vdwg.mxu0
    %v919 = vadd.f32 %v883, %v917
    %v920 = vld [vmem:[%s6] sm:$0xff]
    %v921 = vld [vmem:[%s6 + $0x8] sm:$0xff]
    %v922 = vld [vmem:[%s6 + $0x10] sm:$0xff]
    %v923 = vld [vmem:[%s6 + $0x18] sm:$0xff]
    %v924 = vld [vmem:[%s6 + $0x20] sm:$0xff]
    %v925 = vld [vmem:[%s6 + $0x28] sm:$0xff]
    %v926 = vld [vmem:[%s6 + $0x30] sm:$0xff]
    %v927 = vld [vmem:[%s6 + $0x38] sm:$0xff]
    %v928 = vld [vmem:[%s6 + $0x40] sm:$0xff]
    %v929 = vld [vmem:[%s6 + $0x48] sm:$0xff]
    %v930 = vld [vmem:[%s6 + $0x50] sm:$0xff]
    %v931 = vld [vmem:[%s6 + $0x58] sm:$0xff]
    %v932 = vld [vmem:[%s6 + $0x60] sm:$0xff]
    %v933 = vld [vmem:[%s6 + $0x68] sm:$0xff]
    %v934 = vld [vmem:[%s6 + $0x70] sm:$0xff]
    %v935 = vld [vmem:[%s6 + $0x78] sm:$0xff]
    %936 = vmatpush.msra.mxu0 %v935
    %937 = vmatpush.msra.mxu0 %v934
    %938 = vmatpush.msra.mxu0 %v933
    %939 = vmatpush.msra.mxu0 %v932
    %940 = vmatpush.msra.mxu0 %v931
    %941 = vmatpush.msra.mxu0 %v930
    %942 = vmatpush.msra.mxu0 %v929
    %943 = vmatpush.msra.mxu0 %v928
    %944 = vmatpush.msra.mxu0 %v927
    %945 = vmatpush.msra.mxu0 %v926
    %946 = vmatpush.msra.mxu0 %v925
    %947 = vmatpush.msra.mxu0 %v924
    %948 = vmatpush.msra.mxu0 %v923
    %949 = vmatpush.msra.mxu0 %v922
    %950 = vmatpush.msra.mxu0 %v921
    %951 = vmatpush.msra.mxu0 %v920
    %952 = vmatmul.f32.gmra.mxu0 %v919
    %v953 = vpop.f32.mrf.mxu0
    %v954 = vadd.f32 0.0, %v953
    %955 = vdwg.mxu0
    %s956 = scalar_lea.vmem %s6, 128
    %v957 = vld [vmem:[%s956] sm:$0xff]
    %v958 = vld [vmem:[%s956 + $0x8] sm:$0xff]
    %v959 = vld [vmem:[%s956 + $0x10] sm:$0xff]
    %v960 = vld [vmem:[%s956 + $0x18] sm:$0xff]
    %v961 = vld [vmem:[%s956 + $0x20] sm:$0xff]
    %v962 = vld [vmem:[%s956 + $0x28] sm:$0xff]
    %v963 = vld [vmem:[%s956 + $0x30] sm:$0xff]
    %v964 = vld [vmem:[%s956 + $0x38] sm:$0xff]
    %v965 = vld [vmem:[%s956 + $0x40] sm:$0xff]
    %v966 = vld [vmem:[%s956 + $0x48] sm:$0xff]
    %v967 = vld [vmem:[%s956 + $0x50] sm:$0xff]
    %v968 = vld [vmem:[%s956 + $0x58] sm:$0xff]
    %v969 = vld [vmem:[%s956 + $0x60] sm:$0xff]
    %v970 = vld [vmem:[%s956 + $0x68] sm:$0xff]
    %v971 = vld [vmem:[%s956 + $0x70] sm:$0xff]
    %v972 = vld [vmem:[%s956 + $0x78] sm:$0xff]
    %973 = vmatpush.msra.mxu0 %v972
    %974 = vmatpush.msra.mxu0 %v971
    %975 = vmatpush.msra.mxu0 %v970
    %976 = vmatpush.msra.mxu0 %v969
    %977 = vmatpush.msra.mxu0 %v968
    %978 = vmatpush.msra.mxu0 %v967
    %979 = vmatpush.msra.mxu0 %v966
    %980 = vmatpush.msra.mxu0 %v965
    %981 = vmatpush.msra.mxu0 %v964
    %982 = vmatpush.msra.mxu0 %v963
    %983 = vmatpush.msra.mxu0 %v962
    %984 = vmatpush.msra.mxu0 %v961
    %985 = vmatpush.msra.mxu0 %v960
    %986 = vmatpush.msra.mxu0 %v959
    %987 = vmatpush.msra.mxu0 %v958
    %988 = vmatpush.msra.mxu0 %v957
    %989 = vmatmul.f32.gmra.mxu0 %v919
    %v990 = vpop.f32.mrf.mxu0
    %v991 = vadd.f32 0.0, %v990
    %992 = vdwg.mxu0
    %v993 = vmax.f32 %v954, %v991
    %v994 = vld [vmem:[%s7] sm:$0xf]
    %vm995 = vcmask 64512
    %v997 = vsel %vm995, %v994, 0
    %999 = vmatpush.msra.mxu0 0.0
    %1000 = vmatpush.msra.mxu0 0.0
    %1001 = vmatpush.msra.mxu0 0.0
    %1002 = vmatpush.msra.mxu0 0.0
    %1003 = vmatpush.msra.mxu0 0.0
    %1004 = vmatpush.msra.mxu0 0.0
    %1005 = vmatpush.msra.mxu0 0.0
    %1006 = vmatpush.msra.mxu0 0.0
    %1007 = vmatpush.msra.mxu0 0.0
    %1008 = vmatpush.msra.mxu0 0.0
    %1009 = vmatpush.msra.mxu0 0.0
    %1010 = vmatpush.msra.mxu0 0.0
    %1011 = vmatpush.msra.mxu0 0.0
    %1012 = vmatpush.msra.mxu0 0.0
    %1013 = vmatpush.msra.mxu0 0.0
    %1014 = vmatpush.msra.mxu0 %v993
    %1015 = vmatmul.f32.gmra.mxu0 %v997
    %v1016 = vpop.f32.mrf.mxu0
    %v1017 = vadd.f32 0.0, %v1016
    %1018 = vdwg.mxu0
    %s1019 = scalar_lea.vmem %s7, 4
    %v1020 = vld [vmem:[%s1019] sm:$0xf]
    %v1022 = vsel %vm995, %v1020, 0
    %1024 = vmatpush.msra.mxu0 0.0
    %1025 = vmatpush.msra.mxu0 0.0
    %1026 = vmatpush.msra.mxu0 0.0
    %1027 = vmatpush.msra.mxu0 0.0
    %1028 = vmatpush.msra.mxu0 0.0
    %1029 = vmatpush.msra.mxu0 0.0
    %1030 = vmatpush.msra.mxu0 0.0
    %1031 = vmatpush.msra.mxu0 0.0
    %1032 = vmatpush.msra.mxu0 0.0
    %1033 = vmatpush.msra.mxu0 0.0
    %1034 = vmatpush.msra.mxu0 0.0
    %1035 = vmatpush.msra.mxu0 0.0
    %1036 = vmatpush.msra.mxu0 0.0
    %1037 = vmatpush.msra.mxu0 0.0
    %1038 = vmatpush.msra.mxu0 0.0
    %1039 = vmatpush.msra.mxu0 %v993
    %1040 = vmatmul.f32.gmra.mxu0 %v1022
    %v1041 = vpop.f32.mrf.mxu0
    %v1042 = vadd.f32 0.0, %v1041
    %1043 = vdwg.mxu0
    %v1044 = vmax.f32 %v1017, %v1042
    %v1045 = vld [vmem:[%s8] sm:$0x1]
    %v1047 = vperm.slane %v1045, 0
    %v1049 = vadd.f32 %v1044, %v1047
    %v1050 = vmax.f32 %v1049, 0.0
    %v1051 = vld [vmem:[%s10] sm:$0x1]
    %v1052 = vld [vmem:[#allocation7] sm:$0xff]
    %v1053 = vld [vmem:[#allocation7 + $0x8] sm:$0xff]
    %v1054 = vld [vmem:[#allocation7 + $0x10] sm:$0xff]
    %v1055 = vld [vmem:[#allocation7 + $0x18] sm:$0xff]
    %v1056 = vld [vmem:[#allocation7 + $0x20] sm:$0xff]
    %v1057 = vld [vmem:[#allocation7 + $0x28] sm:$0xff]
    %v1058 = vld [vmem:[#allocation7 + $0x30] sm:$0xff]
    %v1059 = vld [vmem:[#allocation7 + $0x38] sm:$0xff]
    %vm1060 = vcmask 523264
    %v1062 = vsel %vm1060, %v1050, 0
    %1064 = vmatpush.msra.mxu0 0.0
    %1065 = vmatpush.msra.mxu0 0.0
    %1066 = vmatpush.msra.mxu0 0.0
    %1067 = vmatpush.msra.mxu0 0.0
    %1068 = vmatpush.msra.mxu0 0.0
    %1069 = vmatpush.msra.mxu0 0.0
    %1070 = vmatpush.msra.mxu0 0.0
    %1071 = vmatpush.msra.mxu0 0.0
    %1072 = vmatpush.msra.mxu0 %v1059
    %1073 = vmatpush.msra.mxu0 %v1058
    %1074 = vmatpush.msra.mxu0 %v1057
    %1075 = vmatpush.msra.mxu0 %v1056
    %1076 = vmatpush.msra.mxu0 %v1055
    %1077 = vmatpush.msra.mxu0 %v1054
    %1078 = vmatpush.msra.mxu0 %v1053
    %1079 = vmatpush.msra.mxu0 %v1052
    %1080 = vmatmul.f32.gmra.mxu0 %v1062
    %v1081 = vpop.f32.mrf.mxu0
    %v1082 = vadd.f32 0.0, %v1081
    %1083 = vdwg.mxu0
    %v1084 = vadd.f32 %v1051, %v1082
    %s1085 = scalar_lea.vmem [#allocation7], 64
    %v1086 = vld [vmem:[%s1085] sm:$0xff]
    %v1087 = vld [vmem:[%s1085 + $0x8] sm:$0xff]
    %v1088 = vld [vmem:[%s1085 + $0x10] sm:$0xff]
    %v1089 = vld [vmem:[%s1085 + $0x18] sm:$0xff]
    %v1090 = vld [vmem:[%s1085 + $0x20] sm:$0xff]
    %v1091 = vld [vmem:[%s1085 + $0x28] sm:$0xff]
    %v1092 = vld [vmem:[%s1085 + $0x30] sm:$0xff]
    %v1093 = vld [vmem:[%s1085 + $0x38] sm:$0xff]
    %v1094 = vrot.slane %v1050, 1
    %v1095 = vsel %vm1060, %v1094, 0
    %1097 = vmatpush.msra.mxu0 0.0
    %1098 = vmatpush.msra.mxu0 0.0
    %1099 = vmatpush.msra.mxu0 0.0
    %1100 = vmatpush.msra.mxu0 0.0
    %1101 = vmatpush.msra.mxu0 0.0
    %1102 = vmatpush.msra.mxu0 0.0
    %1103 = vmatpush.msra.mxu0 0.0
    %1104 = vmatpush.msra.mxu0 0.0
    %1105 = vmatpush.msra.mxu0 %v1093
    %1106 = vmatpush.msra.mxu0 %v1092
    %1107 = vmatpush.msra.mxu0 %v1091
    %1108 = vmatpush.msra.mxu0 %v1090
    %1109 = vmatpush.msra.mxu0 %v1089
    %1110 = vmatpush.msra.mxu0 %v1088
    %1111 = vmatpush.msra.mxu0 %v1087
    %1112 = vmatpush.msra.mxu0 %v1086
    %1113 = vmatmul.f32.gmra.mxu0 %v1095
    %v1114 = vpop.f32.mrf.mxu0
    %v1115 = vadd.f32 0.0, %v1114
    %1116 = vdwg.mxu0
    %v1117 = vadd.f32 %v1084, %v1115
    %s1118 = scalar_lea.vmem [#allocation7], 128
    %v1119 = vld [vmem:[%s1118] sm:$0xff]
    %v1120 = vld [vmem:[%s1118 + $0x8] sm:$0xff]
    %v1121 = vld [vmem:[%s1118 + $0x10] sm:$0xff]
    %v1122 = vld [vmem:[%s1118 + $0x18] sm:$0xff]
    %v1123 = vld [vmem:[%s1118 + $0x20] sm:$0xff]
    %v1124 = vld [vmem:[%s1118 + $0x28] sm:$0xff]
    %v1125 = vld [vmem:[%s1118 + $0x30] sm:$0xff]
    %v1126 = vld [vmem:[%s1118 + $0x38] sm:$0xff]
    %v1127 = vrot.slane %v1050, 2
    %v1128 = vsel %vm1060, %v1127, 0
    %1130 = vmatpush.msra.mxu0 0.0
    %1131 = vmatpush.msra.mxu0 0.0
    %1132 = vmatpush.msra.mxu0 0.0
    %1133 = vmatpush.msra.mxu0 0.0
    %1134 = vmatpush.msra.mxu0 0.0
    %1135 = vmatpush.msra.mxu0 0.0
    %1136 = vmatpush.msra.mxu0 0.0
    %1137 = vmatpush.msra.mxu0 0.0
    %1138 = vmatpush.msra.mxu0 %v1126
    %1139 = vmatpush.msra.mxu0 %v1125
    %1140 = vmatpush.msra.mxu0 %v1124
    %1141 = vmatpush.msra.mxu0 %v1123
    %1142 = vmatpush.msra.mxu0 %v1122
    %1143 = vmatpush.msra.mxu0 %v1121
    %1144 = vmatpush.msra.mxu0 %v1120
    %1145 = vmatpush.msra.mxu0 %v1119
    %1146 = vmatmul.f32.gmra.mxu0 %v1128
    %v1147 = vpop.f32.mrf.mxu0
    %v1148 = vadd.f32 0.0, %v1147
    %1149 = vdwg.mxu0
    %v1150 = vadd.f32 %v1117, %v1148
    %s1151 = scalar_lea.vmem [#allocation7], 192
    %v1152 = vld [vmem:[%s1151] sm:$0xff]
    %v1153 = vld [vmem:[%s1151 + $0x8] sm:$0xff]
    %v1154 = vld [vmem:[%s1151 + $0x10] sm:$0xff]
    %v1155 = vld [vmem:[%s1151 + $0x18] sm:$0xff]
    %v1156 = vld [vmem:[%s1151 + $0x20] sm:$0xff]
    %v1157 = vld [vmem:[%s1151 + $0x28] sm:$0xff]
    %v1158 = vld [vmem:[%s1151 + $0x30] sm:$0xff]
    %v1159 = vld [vmem:[%s1151 + $0x38] sm:$0xff]
    %v1160 = vrot.slane %v1050, 3
    %v1161 = vsel %vm1060, %v1160, 0
    %1163 = vmatpush.msra.mxu0 0.0
    %1164 = vmatpush.msra.mxu0 0.0
    %1165 = vmatpush.msra.mxu0 0.0
    %1166 = vmatpush.msra.mxu0 0.0
    %1167 = vmatpush.msra.mxu0 0.0
    %1168 = vmatpush.msra.mxu0 0.0
    %1169 = vmatpush.msra.mxu0 0.0
    %1170 = vmatpush.msra.mxu0 0.0
    %1171 = vmatpush.msra.mxu0 %v1159
    %1172 = vmatpush.msra.mxu0 %v1158
    %1173 = vmatpush.msra.mxu0 %v1157
    %1174 = vmatpush.msra.mxu0 %v1156
    %1175 = vmatpush.msra.mxu0 %v1155
    %1176 = vmatpush.msra.mxu0 %v1154
    %1177 = vmatpush.msra.mxu0 %v1153
    %1178 = vmatpush.msra.mxu0 %v1152
    %1179 = vmatmul.f32.gmra.mxu0 %v1161
    %v1180 = vpop.f32.mrf.mxu0
    %v1181 = vadd.f32 0.0, %v1180
    %1182 = vdwg.mxu0
    %v1183 = vadd.f32 %v1150, %v1181
    %v1184 = vmax.f32 %v1183, 0.0
    %v1185 = vld [vmem:[%s11] sm:$0xff]
    %v1186 = vld [vmem:[%s11 + $0x8] sm:$0xff]
    %v1187 = vld [vmem:[%s11 + $0x10] sm:$0xff]
    %v1188 = vld [vmem:[%s11 + $0x18] sm:$0xff]
    %v1189 = vld [vmem:[%s11 + $0x20] sm:$0xff]
    %v1190 = vld [vmem:[%s11 + $0x28] sm:$0xff]
    %v1191 = vld [vmem:[%s11 + $0x30] sm:$0xff]
    %v1192 = vld [vmem:[%s11 + $0x38] sm:$0xff]
    %v1193 = vld [vmem:[%s12] sm:$0x1]
    %v1195 = vsel %vm1060, %v1184, 0
    %1197 = vmatpush.msra.mxu0 0.0
    %1198 = vmatpush.msra.mxu0 0.0
    %1199 = vmatpush.msra.mxu0 0.0
    %1200 = vmatpush.msra.mxu0 0.0
    %1201 = vmatpush.msra.mxu0 0.0
    %1202 = vmatpush.msra.mxu0 0.0
    %1203 = vmatpush.msra.mxu0 0.0
    %1204 = vmatpush.msra.mxu0 0.0
    %1205 = vmatpush.msra.mxu0 %v1192
    %1206 = vmatpush.msra.mxu0 %v1191
    %1207 = vmatpush.msra.mxu0 %v1190
    %1208 = vmatpush.msra.mxu0 %v1189
    %1209 = vmatpush.msra.mxu0 %v1188
    %1210 = vmatpush.msra.mxu0 %v1187
    %1211 = vmatpush.msra.mxu0 %v1186
    %1212 = vmatpush.msra.mxu0 %v1185
    %1213 = vmatmul.f32.gmra.mxu0 %v1195
    %v1214 = vpop.f32.mrf.mxu0
    %v1215 = vadd.f32 %v1193, %v1214
    %1216 = vdwg.mxu0
    %v1217 = vand.u32 2147483647, %v1215
    %vm1218 = vcmp.le.f32.partialorder %v1217, 0.7853982
    %vm1219 = vcmp.lt.s32.totalorder %v1215, 0
    %v1220 = vand.u32 %v1215, 2139095040
    %v1221 = vshrl.u32 %v1220, 23
    %v1222 = vsub.s32 %v1221, 127
    %v1223 = vand.u32 2147483647, %v1215
    %v1224 = vand.u32 %v1223, 8388607
    %v1225 = vor.u32 %v1224, 8388608
    %v1226 = vsub.s32 0, %v1225
    %v1227 = vadd.s32 %v1222, 1
    %vm1228 = vcmp.gt.s32.totalorder %v1227, 0
    %v1229 = vsel %vm1228, %v1227, 0
    %v1230 = vshrl.u32 %v1229, 5
    %v1231 = vand.u32 %v1229, 31
    %v1232 = vsub.s32 32, %v1231
    %v1233 = vshrl.u32 683565275, %v1232
    %v1234 = vshll.u32 683565275, %v1231
    %v1235 = vshrl.u32 2475754826, %v1232
    %v1236 = vor.u32 %v1234, %v1235
    %v1237 = vshll.u32 2475754826, %v1231
    %v1238 = vshrl.u32 2131351028, %v1232
    %v1239 = vor.u32 %v1237, %v1238
    %v1240 = vshll.u32 2131351028, %v1231
    %v1241 = vshrl.u32 2102212464, %v1232
    %v1242 = vor.u32 %v1240, %v1241
    %v1243 = vshll.u32 2102212464, %v1231
    %v1244 = vshrl.u32 920167782, %v1232
    %v1245 = vor.u32 %v1243, %v1244
    %v1246 = vshll.u32 920167782, %v1231
    %v1247 = vshrl.u32 1326507024, %v1232
    %v1248 = vor.u32 %v1246, %v1247
    %vm1249 = vcmp.lt.s32.totalorder %v1230, 1
    %vm1250 = vcmp.lt.s32.totalorder %v1230, 2
    %vm1251 = vcmp.lt.s32.totalorder %v1230, 3
    %vm1252 = vcmp.lt.s32.totalorder %v1230, 4
    %v1253 = vsel %vm1249, %v1233, %v1236
    %v1254 = vsel %vm1252, %v1242, 2102212464
    %v1255 = vsel %vm1251, %v1239, %v1254
    %v1256 = vsel %vm1250, %v1253, %v1255
    %v1257 = vsel %vm1249, %v1236, %v1239
    %v1258 = vsel %vm1252, %v1245, 920167782
    %v1259 = vsel %vm1251, %v1242, %v1258
    %v1260 = vsel %vm1250, %v1257, %v1259
    %v1261 = vsel %vm1249, %v1239, %v1242
    %v1262 = vsel %vm1252, %v1248, 1326507024
    %v1263 = vsel %vm1251, %v1245, %v1262
    %v1264 = vsel %vm1250, %v1261, %v1263
    %v1265 = vshll.u32 %v1225, 8
    %v1266 = vand.u32 %v1265, 65535
    %v1267 = vshrl.u32 %v1265, 16
    %v1268 = vand.u32 %v1264, 65535
    %v1269 = vshrl.u32 %v1264, 16
    %v1270 = vmul.u32 %v1266, %v1268
    %v1271 = vmul.u32 %v1266, %v1269
    %v1272 = vmul.u32 %v1267, %v1268
    %v1273 = vmul.u32 %v1267, %v1269
    %v1274 = vshll.u32 %v1271, 16
    %v1275 = vshrl.u32 %v1271, 16
    %v1276 = vshll.u32 %v1272, 16
    %v1277 = vshrl.u32 %v1272, 16
    %vm1278 = vc.u32 %v1270, %v1274
    %v1279 = vsel %vm1278, 1, 0
    %v1280 = vadd.s32 %v1270, %v1274
    %v1281 = vadd.s32 %v1273, %v1279
    %vm1282 = vc.u32 %v1280, %v1276
    %v1283 = vsel %vm1282, 1, 0
    %v1284 = vadd.s32 %v1280, %v1276
    %v1285 = vadd.s32 %v1281, %v1283
    %v1286 = vadd.s32 %v1285, %v1275
    %v1287 = vadd.s32 %v1286, %v1277
    %v1288 = vand.u32 %v1265, 65535
    %v1289 = vshrl.u32 %v1265, 16
    %v1290 = vand.u32 %v1260, 65535
    %v1291 = vshrl.u32 %v1260, 16
    %v1292 = vmul.u32 %v1288, %v1290
    %v1293 = vmul.u32 %v1288, %v1291
    %v1294 = vmul.u32 %v1289, %v1290
    %v1295 = vmul.u32 %v1289, %v1291
    %v1296 = vshll.u32 %v1293, 16
    %v1297 = vshrl.u32 %v1293, 16
    %v1298 = vshll.u32 %v1294, 16
    %v1299 = vshrl.u32 %v1294, 16
    %vm1300 = vc.u32 %v1292, %v1296
    %v1301 = vsel %vm1300, 1, 0
    %v1302 = vadd.s32 %v1292, %v1296
    %v1303 = vadd.s32 %v1295, %v1301
    %vm1304 = vc.u32 %v1302, %v1298
    %v1305 = vsel %vm1304, 1, 0
    %v1306 = vadd.s32 %v1302, %v1298
    %v1307 = vadd.s32 %v1303, %v1305
    %v1308 = vadd.s32 %v1307, %v1297
    %v1309 = vadd.s32 %v1308, %v1299
    %v1310 = vmul.u32 %v1265, %v1256
    %v1311 = vadd.s32 %v1287, %v1306
    %vm1312 = vc.u32 %v1287, %v1306
    %v1313 = vadd.s32 %v1309, 1
    %v1314 = vsel %vm1312, %v1313, %v1309
    %v1315 = vadd.s32 %v1310, %v1314
    %v1316 = vadd.s32 %v1315, 536870912
    %v1317 = vshrl.u32 %v1316, 30
    %v1318 = vshll.u32 %v1317, 30
    %v1319 = vsub.s32 %v1315, %v1318
    %vm1320 = vcmp.lt.s32.totalorder %v1319, 0
    %v1321 = vsub.s32 0, %v1319
    %v1322 = vsel %vm1320, %v1321, %v1319
    %v1323 = vclz %v1322
    %v1324 = vsub.s32 %v1323, 2
    %vm1325 = vcmp.gt.s32.totalorder 0, %v1324
    %v1326 = vsel %vm1325, 0, %v1324
    %v1327 = vsub.s32 32, %v1326
    %v1328 = vshll.u32 %v1319, %v1326
    %v1329 = vshrl.u32 %v1311, %v1327
    %v1330 = vor.u32 %v1328, %v1329
    %v1331 = vsub.s32 4294967266, %v1326
    %v1332 = vadd.s32 %v1331, 127
    %v1333 = vshll.u32 %v1332, 23
    %v1334 = vor.u32 4788187, %v1333
    %v1335 = vand.u32 2147483647, %v1334
    %v1337 = vcvt.s32.f32 %v1330
    %v1338 = vmul.f32 %v1337, %v1335
    %v1339 = vxor.u32 %v1338, 2147483648
    %v1340 = vsel %vm1219, %v1339, %v1338
    %v1341 = vsub.s32 4, %v1317
    %v1342 = vsel %vm1219, %v1341, %v1317
    %v1343 = vsel %vm1218, %v1215, %v1340
    %v1344 = vsel %vm1218, 0, %v1342
    %v1345 = vmul.f32 %v1343, %v1343
    %v1346 = vmul.f32 %v1345, -0.001358992
    %v1347 = vadd.f32 %v1346, 0.041655596
    %v1348 = vmul.f32 %v1345, %v1347
    %v1349 = vadd.f32 %v1348, -0.4999988
    %v1350 = vmul.f32 %v1345, %v1349
    %v1351 = vadd.f32 1.0, %v1350
    %v1352 = vmul.f32 %v1343, %v1343
    %v1353 = vmul.f32 %v1352, -0.00019511016
    %v1354 = vadd.f32 %v1353, 0.008332121
    %v1355 = vmul.f32 %v1352, %v1354
    %v1356 = vadd.f32 %v1355, -0.16666654
    %v1357 = vmul.f32 %v1352, %v1356
    %v1358 = vadd.f32 %v1357, 1.0
    %v1359 = vmul.f32 %v1358, %v1343
    %vm1360 = vweird.f32 %v1215
    %v1361 = vadd.s32 %v1344, 3
    %v1362 = vand.u32 %v1361, 3
    %vm1363 = vcmp.lt.s32.totalorder %v1362, 2
    %vm1364 = vcmp.eq.s32.totalorder %v1362, 0
    %v1365 = vxor.u32 %v1359, 2147483648
    %v1366 = vsel %vm1364, %v1351, %v1365
    %vm1367 = vcmp.eq.s32.totalorder %v1362, 2
    %v1368 = vxor.u32 %v1351, 2147483648
    %v1369 = vsel %vm1367, %v1368, %v1359
    %v1370 = vsel %vm1363, %v1366, %v1369
    %v1371 = vsel %vm1360, nan, %v1370
    %v1372 = vand.u32 2147483647, %v1215
    %vm1373 = vcmp.le.f32.partialorder %v1372, 0.7853982
    %vm1374 = vcmp.lt.s32.totalorder %v1215, 0
    %v1375 = vand.u32 %v1215, 2139095040
    %v1376 = vshrl.u32 %v1375, 23
    %v1377 = vsub.s32 %v1376, 127
    %v1378 = vand.u32 2147483647, %v1215
    %v1379 = vand.u32 %v1378, 8388607
    %v1380 = vor.u32 %v1379, 8388608
    %v1381 = vsub.s32 0, %v1380
    %v1382 = vadd.s32 %v1377, 1
    %vm1383 = vcmp.gt.s32.totalorder %v1382, 0
    %v1384 = vsel %vm1383, %v1382, 0
    %v1385 = vshrl.u32 %v1384, 5
    %v1386 = vand.u32 %v1384, 31
    %v1387 = vsub.s32 32, %v1386
    %v1388 = vshrl.u32 683565275, %v1387
    %v1389 = vshll.u32 683565275, %v1386
    %v1390 = vshrl.u32 2475754826, %v1387
    %v1391 = vor.u32 %v1389, %v1390
    %v1392 = vshll.u32 2475754826, %v1386
    %v1393 = vshrl.u32 2131351028, %v1387
    %v1394 = vor.u32 %v1392, %v1393
    %v1395 = vshll.u32 2131351028, %v1386
    %v1396 = vshrl.u32 2102212464, %v1387
    %v1397 = vor.u32 %v1395, %v1396
    %v1398 = vshll.u32 2102212464, %v1386
    %v1399 = vshrl.u32 920167782, %v1387
    %v1400 = vor.u32 %v1398, %v1399
    %v1401 = vshll.u32 920167782, %v1386
    %v1402 = vshrl.u32 1326507024, %v1387
    %v1403 = vor.u32 %v1401, %v1402
    %vm1404 = vcmp.lt.s32.totalorder %v1385, 1
    %vm1405 = vcmp.lt.s32.totalorder %v1385, 2
    %vm1406 = vcmp.lt.s32.totalorder %v1385, 3
    %vm1407 = vcmp.lt.s32.totalorder %v1385, 4
    %v1408 = vsel %vm1404, %v1388, %v1391
    %v1409 = vsel %vm1407, %v1397, 2102212464
    %v1410 = vsel %vm1406, %v1394, %v1409
    %v1411 = vsel %vm1405, %v1408, %v1410
    %v1412 = vsel %vm1404, %v1391, %v1394
    %v1413 = vsel %vm1407, %v1400, 920167782
    %v1414 = vsel %vm1406, %v1397, %v1413
    %v1415 = vsel %vm1405, %v1412, %v1414
    %v1416 = vsel %vm1404, %v1394, %v1397
    %v1417 = vsel %vm1407, %v1403, 1326507024
    %v1418 = vsel %vm1406, %v1400, %v1417
    %v1419 = vsel %vm1405, %v1416, %v1418
    %v1420 = vshll.u32 %v1380, 8
    %v1421 = vand.u32 %v1420, 65535
    %v1422 = vshrl.u32 %v1420, 16
    %v1423 = vand.u32 %v1419, 65535
    %v1424 = vshrl.u32 %v1419, 16
    %v1425 = vmul.u32 %v1421, %v1423
    %v1426 = vmul.u32 %v1421, %v1424
    %v1427 = vmul.u32 %v1422, %v1423
    %v1428 = vmul.u32 %v1422, %v1424
    %v1429 = vshll.u32 %v1426, 16
    %v1430 = vshrl.u32 %v1426, 16
    %v1431 = vshll.u32 %v1427, 16
    %v1432 = vshrl.u32 %v1427, 16
    %vm1433 = vc.u32 %v1425, %v1429
    %v1434 = vsel %vm1433, 1, 0
    %v1435 = vadd.s32 %v1425, %v1429
    %v1436 = vadd.s32 %v1428, %v1434
    %vm1437 = vc.u32 %v1435, %v1431
    %v1438 = vsel %vm1437, 1, 0
    %v1439 = vadd.s32 %v1435, %v1431
    %v1440 = vadd.s32 %v1436, %v1438
    %v1441 = vadd.s32 %v1440, %v1430
    %v1442 = vadd.s32 %v1441, %v1432
    %v1443 = vand.u32 %v1420, 65535
    %v1444 = vshrl.u32 %v1420, 16
    %v1445 = vand.u32 %v1415, 65535
    %v1446 = vshrl.u32 %v1415, 16
    %v1447 = vmul.u32 %v1443, %v1445
    %v1448 = vmul.u32 %v1443, %v1446
    %v1449 = vmul.u32 %v1444, %v1445
    %v1450 = vmul.u32 %v1444, %v1446
    %v1451 = vshll.u32 %v1448, 16
    %v1452 = vshrl.u32 %v1448, 16
    %v1453 = vshll.u32 %v1449, 16
    %v1454 = vshrl.u32 %v1449, 16
    %vm1455 = vc.u32 %v1447, %v1451
    %v1456 = vsel %vm1455, 1, 0
    %v1457 = vadd.s32 %v1447, %v1451
    %v1458 = vadd.s32 %v1450, %v1456
    %vm1459 = vc.u32 %v1457, %v1453
    %v1460 = vsel %vm1459, 1, 0
    %v1461 = vadd.s32 %v1457, %v1453
    %v1462 = vadd.s32 %v1458, %v1460
    %v1463 = vadd.s32 %v1462, %v1452
    %v1464 = vadd.s32 %v1463, %v1454
    %v1465 = vmul.u32 %v1420, %v1411
    %v1466 = vadd.s32 %v1442, %v1461
    %vm1467 = vc.u32 %v1442, %v1461
    %v1468 = vadd.s32 %v1464, 1
    %v1469 = vsel %vm1467, %v1468, %v1464
    %v1470 = vadd.s32 %v1465, %v1469
    %v1471 = vadd.s32 %v1470, 536870912
    %v1472 = vshrl.u32 %v1471, 30
    %v1473 = vshll.u32 %v1472, 30
    %v1474 = vsub.s32 %v1470, %v1473
    %vm1475 = vcmp.lt.s32.totalorder %v1474, 0
    %v1476 = vsub.s32 0, %v1474
    %v1477 = vsel %vm1475, %v1476, %v1474
    %v1478 = vclz %v1477
    %v1479 = vsub.s32 %v1478, 2
    %vm1480 = vcmp.gt.s32.totalorder 0, %v1479
    %v1481 = vsel %vm1480, 0, %v1479
    %v1482 = vsub.s32 32, %v1481
    %v1483 = vshll.u32 %v1474, %v1481
    %v1484 = vshrl.u32 %v1466, %v1482
    %v1485 = vor.u32 %v1483, %v1484
    %v1486 = vsub.s32 4294967266, %v1481
    %v1487 = vadd.s32 %v1486, 127
    %v1488 = vshll.u32 %v1487, 23
    %v1489 = vor.u32 4788187, %v1488
    %v1490 = vand.u32 2147483647, %v1489
    %v1492 = vcvt.s32.f32 %v1485
    %v1493 = vmul.f32 %v1492, %v1490
    %v1494 = vxor.u32 %v1493, 2147483648
    %v1495 = vsel %vm1374, %v1494, %v1493
    %v1496 = vsub.s32 4, %v1472
    %v1497 = vsel %vm1374, %v1496, %v1472
    %v1498 = vsel %vm1373, %v1215, %v1495
    %v1499 = vsel %vm1373, 0, %v1497
    %v1500 = vmul.f32 %v1498, %v1498
    %v1501 = vmul.f32 %v1500, -0.001358992
    %v1502 = vadd.f32 %v1501, 0.041655596
    %v1503 = vmul.f32 %v1500, %v1502
    %v1504 = vadd.f32 %v1503, -0.4999988
    %v1505 = vmul.f32 %v1500, %v1504
    %v1506 = vadd.f32 1.0, %v1505
    %v1507 = vmul.f32 %v1498, %v1498
    %v1508 = vmul.f32 %v1507, -0.00019511016
    %v1509 = vadd.f32 %v1508, 0.008332121
    %v1510 = vmul.f32 %v1507, %v1509
    %v1511 = vadd.f32 %v1510, -0.16666654
    %v1512 = vmul.f32 %v1507, %v1511
    %v1513 = vadd.f32 %v1512, 1.0
    %v1514 = vmul.f32 %v1513, %v1498
    %vm1515 = vweird.f32 %v1215
    %v1516 = vand.u32 %v1499, 3
    %vm1517 = vcmp.lt.s32.totalorder %v1516, 2
    %vm1518 = vcmp.eq.s32.totalorder %v1516, 0
    %v1519 = vxor.u32 %v1514, 2147483648
    %v1520 = vsel %vm1518, %v1506, %v1519
    %vm1521 = vcmp.eq.s32.totalorder %v1516, 2
    %v1522 = vxor.u32 %v1506, 2147483648
    %v1523 = vsel %vm1521, %v1522, %v1514
    %v1524 = vsel %vm1517, %v1520, %v1523
    %v1525 = vsel %vm1515, nan, %v1524
    %1527 = vrot.lane.b32.xlu0 %v1525, 126
    %v1528 = vpop.permute.xlu0 %1527
    %v1530 = vmul.f32 %v1371, %v1528
    %v1531 = vadd.f32 %v1530, 1.0
    %v1532 = vmul.f32 %v1531, 0.5
    %v1533 = vlaneseq
    %v1534 = vand.u32 %v1533, 127
    %vm1535 = vcmp.eq.s32.totalorder %v1534, 0
    %v1536 = vsub.f32 1.0, %v1532
    %1538 = vset.pattern.permute.xlu0 0
    %1539 = vperm.xlu0 %1538, %v1532
    %v1540 = vpop.permute.xlu0 %1539
    %1543 = vset.pattern.permute.xlu0 0
    %1544 = vperm.xlu0 %1543, %v1536
    %v1545 = vpop.permute.xlu0 %1544
    %v1547 = vsel %vm1535, %v1540, %v1545
    %vm1548 = vcmask 8192
    %1549 = vst.msk [vmem:[#allocation8] sm:$0x1] %vm1548, %v1547
    // Predicated region
    $region66: #{net_forward.1} parent=1 // pred_check
      _
    $region67: #{net_forward.1} parent=1 // pred_check_branch
      %1551 = sbr.rel (0) target = $region69
    $region68: #{net_forward.1} parent=1 // pred_region
      %1553 = vsyncadd [#allocation4], 0
      %s1555 = sshll.u32 [#allocation8], 4
      %s1556 = int_to_ptr.vmem [resolvable:$true] %s1555
      %s1557 = sshll.u32 %s13, 4
      %s1558 = int_to_ptr.hbm [resolvable:$true] %s1557
      %1560 = dma.vmem_to_hbm [thread:$0]  %s1556, 16, %s1558, [#allocation4]
    $region69: #{net_forward.1} parent=1 // pred_fallthru
      _
    // Predicated region
    $region70: #{net_forward.1} parent=1 // pred_check
      _
    $region71: #{net_forward.1} parent=1 // pred_check_branch
      %1562 = sbr.rel (0) target = $region73
    $region72: #{net_forward.1} parent=1 // pred_region
      %1564 = dma.done [#allocation4], 16
    $region73: #{net_forward.1} parent=1 // pred_fallthru
      _
    %1565 = vsyncpa [#allocation3], 1
    %1566 = vsyncpa [#allocation6], 1
    %1567 = vsyncpa [#allocation4], 1

</llo_original>
